<compile_context>
chip_gen: v7x
topology: tpu7x:2x2x1
jax: 0.10.0
libtpu: 0.0.40
codegen_flags: <defaults>
</compile_context>

<pallas_src>
import functools
import math

import jax
import jax.numpy as jnp
from jax.experimental import pallas as pl
from jax.experimental.pallas import tpu as pltpu

_LANE = 128          # TPU lane width: pad feature dims to this
_DEFAULT_TILE = 512  # requested row / K tile for the [N, N] aggregation matmul


def _round_up(v, m):
    return ((v + m - 1) // m) * m


def _pad2d(a, rows, cols):
    out = jnp.zeros((rows, cols), a.dtype)
    return out.at[: a.shape[0], : a.shape[1]].set(a)


def _pick_tile(n, requested):
    """Largest 128-multiple tile <= requested that keeps >= 2 row tiles
    (so the 'parallel' row axis can shard across v7x's two TensorCores)."""
    n128 = _round_up(n, _LANE)
    half = max(_LANE, (n128 // 2) // _LANE * _LANE)
    req = max(_LANE, _round_up(requested, _LANE))
    return min(req, half)


def _l2_normalize(h, eps=1e-12):
    # torch.nn.functional.normalize(p=2, dim=-1): x / max(||x||_2, eps)
    # single rsqrt (EUP slot) instead of sqrt + reciprocal
    sumsq = jnp.sum(h * h, axis=-1, keepdims=True)
    return h * jax.lax.rsqrt(jnp.maximum(sumsq, eps * eps))


def _sage_layer1_kernel(normalize, tile_n,
                        b_ref, x_ref, invdeg_ref,
                        w1l_ref, w1r_ref, b1_ref,
                        w2l_ref, w2r_ref, b2_ref,
                        z2_ref, s2_ref, acc_ref):
    """Layer 1 (SAGEConv + ReLU) fused with the narrow layer-2 linears.

    x_ref is the full (VMEM-resident) padded feature matrix; the K-tile and the
    self-row tile are sliced in-kernel.  B is streamed as bf16 tiles; the
    per-row 1/deg mean scale is applied (in f32) in the k==last epilogue.
    Emits z2 = h @ W2_l and s2 = h @ W2_r + b2 so layer 2 computes A @ z2 + s2.
    """
    i = pl.program_id(0)
    k = pl.program_id(1)

    @pl.when(k == 0)
    def _():
        acc_ref[...] = jnp.zeros_like(acc_ref)

    # sum aggregation:  acc += B[i-tile, k-tile] @ x[k-tile, :]   (f32 accumulate)
    xk = x_ref[pl.ds(pl.multiple_of(k * tile_n, tile_n), tile_n), :]
    acc_ref[...] += jnp.dot(b_ref[...].astype(jnp.float32), xk,
                            preferred_element_type=jnp.float32)

    @pl.when(k == pl.num_programs(1) - 1)
    def _():
        agg = acc_ref[...] * invdeg_ref[...]          # mean = (1/deg) * sum, exact in f32
        xi = x_ref[pl.ds(pl.multiple_of(i * tile_n, tile_n), tile_n), :]
        h = (jnp.dot(agg, w1l_ref[...], preferred_element_type=jnp.float32)
             + jnp.dot(xi, w1r_ref[...], preferred_element_type=jnp.float32)
             + b1_ref[...])
        if normalize:
            h = _l2_normalize(h)      # padded hidden columns are exactly 0
        h = jnp.maximum(h, 0.0)       # ReLU (dropout is identity in eval mode)
        z2_ref[...] = jnp.dot(h, w2l_ref[...], preferred_element_type=jnp.float32)
        s2_ref[...] = (jnp.dot(h, w2r_ref[...], preferred_element_type=jnp.float32)
                       + b2_ref[...])


def _sage_layer2_kernel(normalize, num_classes, tile_n,
                        b_ref, z_ref, invdeg_ref, s_ref,
                        out_ref, acc_ref):
    """Layer 2:  o = (1/deg) * (B @ z2) + s2, optional L2-norm, masked log_softmax.

    z_ref is the full (VMEM-resident) z2 matrix; the K-tile is sliced in-kernel.
    """
    k = pl.program_id(1)

    @pl.when(k == 0)
    def _():
        acc_ref[...] = jnp.zeros_like(acc_ref)

    zk = z_ref[pl.ds(pl.multiple_of(k * tile_n, tile_n), tile_n), :]
    acc_ref[...] += jnp.dot(b_ref[...].astype(jnp.float32), zk,
                            preferred_element_type=jnp.float32)

    @pl.when(k == pl.num_programs(1) - 1)
    def _():
        o = acc_ref[...] * invdeg_ref[...] + s_ref[...]
        if normalize:
            o = _l2_normalize(o)      # padded class columns are exactly 0 here

        lane = jax.lax.broadcasted_iota(jnp.int32, o.shape, 1)
        valid = lane < num_classes
        o = jnp.where(valid, o, -jnp.inf)

        m = jnp.max(o, axis=-1, keepdims=True)
        shifted = o - m
        sum_exp = jnp.sum(jnp.where(valid, jnp.exp(shifted), 0.0),
                          axis=-1, keepdims=True)
        log_probs = shifted - jnp.log(sum_exp)
        out_ref[...] = jnp.where(valid, log_probs, 0.0)


def _vmem_limit_bytes(block_bytes):
    """Generation-aware VMEM scoped limit sized from the actual block footprint."""
    try:
        cap = int(pltpu.get_tpu_info().vmem_capacity_bytes)   # 64 MiB v7x, 128 MiB v5e/v6e
    except Exception:
        cap = 64 << 20                                        # conservative (v7x) fallback
    cap = (cap * 7) // 8                                      # headroom for Mosaic scratch
    need = 2 * sum(block_bytes) + (4 << 20)                   # ~double-buffered pipeline
    return int(min(max(need, 32 << 20), cap))


def graphsage_forward(x, adj_counts, inv_deg, params, *, normalize,
                      tile_n=_DEFAULT_TILE):
    """2-layer GraphSAGE forward (inference) via two tiled Pallas calls."""
    n, input_dim = x.shape
    hidden_dim = params["w1l"].shape[1]
    num_classes = params["w2l"].shape[1]
    f32 = jnp.float32

    # ---- pad to TPU-friendly shapes ------------------------------------
    tile_n = _pick_tile(n, tile_n)
    n_p = _round_up(n, tile_n)
    fin_p = _round_up(input_dim, _LANE)
    h_p = _round_up(hidden_dim, _LANE)
    c_p = _round_up(num_classes, _LANE)

    # B entries are small integer edge counts -> exact in bf16; the mean
    # (1/deg) scale stays in f32 and is applied in the kernel epilogue.
    b_p = _pad2d(adj_counts.astype(f32), n_p, n_p).astype(jnp.bfloat16)
    invdeg_p = _pad2d(inv_deg.astype(f32).reshape(-1, 1), n_p, 1)
    x_p = _pad2d(x.astype(f32), n_p, fin_p)
    w1l = _pad2d(params["w1l"].astype(f32), fin_p, h_p)
    w1r = _pad2d(params["w1r"].astype(f32), fin_p, h_p)
    b1 = _pad2d(params["b1"].astype(f32), 1, h_p)
    w2l = _pad2d(params["w2l"].astype(f32), h_p, c_p)
    w2r = _pad2d(params["w2r"].astype(f32), h_p, c_p)
    b2 = _pad2d(params["b2"].astype(f32), 1, c_p)

    grid = (n_p // tile_n, n_p // tile_n)
    sem = ("parallel", "arbitrary")   # rows megacore-parallel, reduction last

    # ---- layer 1 (+ fused narrow layer-2 linears) -----------------------
    l1_bytes = [
        tile_n * tile_n * 2,                 # B tile (bf16), streamed
        n_p * fin_p * 4,                     # x, VMEM-resident
        tile_n * 4,                          # 1/deg rows
        fin_p * h_p * 4, fin_p * h_p * 4, h_p * 4,
        h_p * c_p * 4, h_p * c_p * 4, c_p * 4,
        tile_n * c_p * 4, tile_n * c_p * 4,  # z2, s2 outputs
        tile_n * fin_p * 4,                  # f32 accumulator scratch
    ]
    z2, s2 = pl.pallas_call(
        functools.partial(_sage_layer1_kernel, normalize, tile_n),
        out_shape=(jax.ShapeDtypeStruct((n_p, c_p), f32),
                   jax.ShapeDtypeStruct((n_p, c_p), f32)),
        grid_spec=pltpu.PrefetchScalarGridSpec(
            num_scalar_prefetch=0,
            grid=grid,
            in_specs=[
                pl.BlockSpec((tile_n, tile_n), lambda i, k: (i, k)),  # B tile (bf16)
                pl.BlockSpec((n_p, fin_p), lambda i, k: (0, 0)),      # x (resident)
                pl.BlockSpec((tile_n, 1), lambda i, k: (i, 0)),       # 1/deg rows
                pl.BlockSpec((fin_p, h_p), lambda i, k: (0, 0)),      # W1_l
                pl.BlockSpec((fin_p, h_p), lambda i, k: (0, 0)),      # W1_r
                pl.BlockSpec((1, h_p), lambda i, k: (0, 0)),          # b1
                pl.BlockSpec((h_p, c_p), lambda i, k: (0, 0)),        # W2_l
                pl.BlockSpec((h_p, c_p), lambda i, k: (0, 0)),        # W2_r
                pl.BlockSpec((1, c_p), lambda i, k: (0, 0)),          # b2
            ],
            out_specs=[
                pl.BlockSpec((tile_n, c_p), lambda i, k: (i, 0)),     # z2
                pl.BlockSpec((tile_n, c_p), lambda i, k: (i, 0)),     # s2
            ],
            scratch_shapes=[pltpu.VMEM((tile_n, fin_p), f32)],
        ),
        compiler_params=pltpu.CompilerParams(
            dimension_semantics=sem,
            vmem_limit_bytes=_vmem_limit_bytes(l1_bytes),
        ),
    )(b_p, x_p, invdeg_p, w1l, w1r, b1, w2l, w2r, b2)

    # ---- layer 2 (+ log_softmax epilogue) -------------------------------
    l2_bytes = [
        tile_n * tile_n * 2,                 # B tile (bf16), streamed
        n_p * c_p * 4,                       # z2, VMEM-resident
        tile_n * 4,                          # 1/deg rows
        tile_n * c_p * 4,                    # s2 rows
        tile_n * c_p * 4,                    # output tile
        tile_n * c_p * 4,                    # accumulator scratch
    ]
    out_p = pl.pallas_call(
        functools.partial(_sage_layer2_kernel, normalize, num_classes, tile_n),
        out_shape=jax.ShapeDtypeStruct((n_p, c_p), f32),
        grid_spec=pltpu.PrefetchScalarGridSpec(
            num_scalar_prefetch=0,
            grid=grid,
            in_specs=[
                pl.BlockSpec((tile_n, tile_n), lambda i, k: (i, k)),  # B tile (bf16)
                pl.BlockSpec((n_p, c_p), lambda i, k: (0, 0)),        # z2 (resident)
                pl.BlockSpec((tile_n, 1), lambda i, k: (i, 0)),       # 1/deg rows
                pl.BlockSpec((tile_n, c_p), lambda i, k: (i, 0)),     # s2 (self rows)
            ],
            out_specs=pl.BlockSpec((tile_n, c_p), lambda i, k: (i, 0)),
            scratch_shapes=[pltpu.VMEM((tile_n, c_p), f32)],
        ),
        compiler_params=pltpu.CompilerParams(
            dimension_semantics=sem,
            vmem_limit_bytes=_vmem_limit_bytes(l2_bytes),
        ),
    )(b_p, z2, invdeg_p, s2)

    return out_p[:n, :num_classes]


def build_graph(edge_index, num_nodes):
    """Count adjacency B (B[i,j] = #edges j->i) and per-row mean scale 1/deg
    from a PyG-style [2, E] edge_index (src, dst)."""
    src, dst = edge_index[0], edge_index[1]
    b = jnp.zeros((num_nodes, num_nodes), jnp.float32).at[dst, src].add(1.0)
    deg = jnp.sum(b, axis=1)
    inv_deg = 1.0 / jnp.maximum(deg, 1.0)
    return b, inv_deg


def init_params(key, input_dim, hidden_dim, num_classes):
    ks = jax.random.split(key, 6)

    def lin(k, fan_in, fan_out):
        bound = 1.0 / jnp.sqrt(fan_in)
        return jax.random.uniform(k, (fan_in, fan_out), jnp.float32, -bound, bound)

    return {
        "w1l": lin(ks[0], input_dim, hidden_dim),
        "w1r": lin(ks[1], input_dim, hidden_dim),
        "b1": jax.random.uniform(ks[2], (1, hidden_dim), jnp.float32,
                                 -1.0 / jnp.sqrt(input_dim), 1.0 / jnp.sqrt(input_dim)),
        "w2l": lin(ks[3], hidden_dim, num_classes),
        "w2r": lin(ks[4], hidden_dim, num_classes),
        "b2": jax.random.uniform(ks[5], (1, num_classes), jnp.float32,
                                 -1.0 / jnp.sqrt(hidden_dim), 1.0 / jnp.sqrt(hidden_dim)),
    }


def _l2_normalize_ref(h, eps=1e-12):
    norm = jnp.sqrt(jnp.sum(h * h, axis=-1, keepdims=True))
    return h / jnp.maximum(norm, eps)


def reference_forward(x, a_mean, params, *, normalize):
    """Pure-JAX reference for correctness checking."""
    def sage(x_, wl, wr, b):
        out = (a_mean @ x_) @ wl + x_ @ wr + b
        if normalize:
            out = _l2_normalize_ref(out)
        return out

    h = jax.nn.relu(sage(x, params["w1l"], params["w1r"], params["b1"]))
    o = sage(h, params["w2l"], params["w2r"], params["b2"])
    return jax.nn.log_softmax(o, axis=1)


if __name__ == "__main__":
    key = jax.random.PRNGKey(0)
    k_x, k_e, k_p = jax.random.split(key, 3)

    num_nodes = 200       # pads to 256 -> 2x2 grid (exercises tiling, reduction, in-kernel slicing)
    num_edges = 800
    input_dim = 16
    hidden_dim = 32
    num_classes = 8
    normalize = True

    x = jax.random.normal(k_x, (num_nodes, input_dim), jnp.float32)
    edge_index = jax.random.randint(k_e, (2, num_edges), 0, num_nodes)
    adj_counts, inv_deg = build_graph(edge_index, num_nodes)
    params = init_params(k_p, input_dim, hidden_dim, num_classes)

    out = graphsage_forward(x, adj_counts, inv_deg, params, normalize=normalize)
    out = jax.block_until_ready(out)

    a_mean = adj_counts * inv_deg[:, None]
    ref = reference_forward(x, a_mean, params, normalize=normalize)
    assert out.shape == (num_nodes, num_classes)
    assert jnp.allclose(out, ref, atol=2e-4, rtol=2e-4), "mismatch vs reference"

    print("KERNEL_OK")
</pallas_src>

<mosaic_0001>
module attributes {stable_mosaic.version = 11 : i64} {
  func.func @_sage_layer1_kernel(%arg0: i32, %arg1: i32, %arg2: memref<128x128xbf16, #tpu.memory_space<vmem>>, %arg3: memref<256x128xf32, #tpu.memory_space<vmem>>, %arg4: memref<128x1xf32, #tpu.memory_space<vmem>>, %arg5: memref<128x128xf32, #tpu.memory_space<vmem>>, %arg6: memref<128x128xf32, #tpu.memory_space<vmem>>, %arg7: memref<1x128xf32, #tpu.memory_space<vmem>>, %arg8: memref<128x128xf32, #tpu.memory_space<vmem>>, %arg9: memref<128x128xf32, #tpu.memory_space<vmem>>, %arg10: memref<1x128xf32, #tpu.memory_space<vmem>>, %arg11: memref<128x128xf32, #tpu.memory_space<vmem>>, %arg12: memref<128x128xf32, #tpu.memory_space<vmem>>, %arg13: memref<128x128xf32, #tpu.memory_space<vmem>>) attributes {dimension_semantics = [#tpu.dimension_semantics<parallel>, #tpu.dimension_semantics<arbitrary>], iteration_bounds = array<i64: 2, 2>, scalar_prefetch = 0 : i64, scratch_operands = 1 : i64, tpu.core_type = #tpu.core_type<tc>, window_params = [{transform_indices = @transform_0, window_bounds = array<i64: 128, 128>}, {pipeline_mode = #tpu.pipeline_mode<synchronous>, transform_indices = @transform_1, window_bounds = array<i64: 256, 128>}, {transform_indices = @transform_2, window_bounds = array<i64: 128, 1>}, {pipeline_mode = #tpu.pipeline_mode<synchronous>, transform_indices = @transform_3, window_bounds = array<i64: 128, 128>}, {pipeline_mode = #tpu.pipeline_mode<synchronous>, transform_indices = @transform_4, window_bounds = array<i64: 128, 128>}, {pipeline_mode = #tpu.pipeline_mode<synchronous>, transform_indices = @transform_5, window_bounds = array<i64: 1, 128>}, {pipeline_mode = #tpu.pipeline_mode<synchronous>, transform_indices = @transform_6, window_bounds = array<i64: 128, 128>}, {pipeline_mode = #tpu.pipeline_mode<synchronous>, transform_indices = @transform_7, window_bounds = array<i64: 128, 128>}, {pipeline_mode = #tpu.pipeline_mode<synchronous>, transform_indices = @transform_8, window_bounds = array<i64: 1, 128>}, {transform_indices = @transform_9, window_bounds = array<i64: 128, 128>}, {transform_indices = @transform_10, window_bounds = array<i64: 128, 128>}]} {
    %c0_i32 = arith.constant 0 : i32
    %0 = arith.cmpi eq, %arg1, %c0_i32 : i32
    %1 = arith.extui %0 : i1 to i32
    %c0_i32_0 = arith.constant 0 : i32
    %2 = arith.cmpi ne, %1, %c0_i32_0 : i32
    scf.if %2 {
      %cst_8 = arith.constant 0.000000e+00 : f32
      %16 = vector.broadcast %cst_8 : f32 to vector<128x128xf32>
      %c0_9 = arith.constant 0 : index
      %c0_10 = arith.constant 0 : index
      %17 = vector.load %arg13[%c0_9, %c0_10] : memref<128x128xf32, #tpu.memory_space<vmem>>, vector<128x128xf32>
      tpu.vector_store %arg13[%c0_9, %c0_10], %16 {strides = array<i32>} : memref<128x128xf32, #tpu.memory_space<vmem>>, vector<128x128xf32>,
    } else {
    }
    %c128_i32 = arith.constant 128 : i32
    %3 = arith.muli %arg1, %c128_i32 : i32
    %4 = tpu.assume_multiple %3, 128 : i32
    %5 = arith.index_cast %4 : i32 to index
    %c0 = arith.constant 0 : index
    %6 = vector.load %arg3[%5, %c0] : memref<256x128xf32, #tpu.memory_space<vmem>>, vector<128x128xf32>
    %c0_1 = arith.constant 0 : index
    %c0_2 = arith.constant 0 : index
    %7 = vector.load %arg13[%c0_1, %c0_2] : memref<128x128xf32, #tpu.memory_space<vmem>>, vector<128x128xf32>
    %c0_3 = arith.constant 0 : index
    %c0_4 = arith.constant 0 : index
    %8 = vector.load %arg2[%c0_3, %c0_4] : memref<128x128xbf16, #tpu.memory_space<vmem>>, vector<128x128xbf16>
    %9 = arith.extf %8 : vector<128x128xbf16> to vector<128x128xf32>
    %cst = arith.constant dense<0.000000e+00> : vector<128x128xf32>
    %10 = tpu.matmul %9, %6, %cst {dimension_numbers = #tpu.dot_dimension_numbers<[1], [0], [0], [1], [0, 0, 1, 1], [], []>} : vector<128x128xf32>, vector<128x128xf32>, vector<128x128xf32> -> vector<128x128xf32>
    %11 = arith.addf %7, %10 : vector<128x128xf32>
    %c0_5 = arith.constant 0 : index
    %c0_6 = arith.constant 0 : index
    %12 = vector.load %arg13[%c0_5, %c0_6] : memref<128x128xf32, #tpu.memory_space<vmem>>, vector<128x128xf32>
    tpu.vector_store %arg13[%c0_5, %c0_6], %11 {strides = array<i32>} : memref<128x128xf32, #tpu.memory_space<vmem>>, vector<128x128xf32>,
    %c1_i32 = arith.constant 1 : i32
    %13 = arith.cmpi eq, %arg1, %c1_i32 : i32
    %14 = arith.extui %13 : i1 to i32
    %c0_i32_7 = arith.constant 0 : i32
    %15 = arith.cmpi ne, %14, %c0_i32_7 : i32
    scf.if %15 {
      %c0_8 = arith.constant 0 : index
      %c0_9 = arith.constant 0 : index
      %16 = vector.load %arg13[%c0_8, %c0_9] : memref<128x128xf32, #tpu.memory_space<vmem>>, vector<128x128xf32>
      %c0_10 = arith.constant 0 : index
      %c0_11 = arith.constant 0 : index
      %17 = vector.load %arg4[%c0_10, %c0_11] : memref<128x1xf32, #tpu.memory_space<vmem>>, vector<128x1xf32>
      %18 = vector.broadcast %17 : vector<128x1xf32> to vector<128x128xf32>
      %19 = arith.mulf %16, %18 : vector<128x128xf32>
      %c128_i32_12 = arith.constant 128 : i32
      %20 = arith.muli %arg0, %c128_i32_12 : i32
      %21 = tpu.assume_multiple %20, 128 : i32
      %22 = arith.index_cast %21 : i32 to index
      %c0_13 = arith.constant 0 : index
      %23 = vector.load %arg3[%22, %c0_13] : memref<256x128xf32, #tpu.memory_space<vmem>>, vector<128x128xf32>
      %c0_14 = arith.constant 0 : index
      %c0_15 = arith.constant 0 : index
      %24 = vector.load %arg5[%c0_14, %c0_15] : memref<128x128xf32, #tpu.memory_space<vmem>>, vector<128x128xf32>
      %cst_16 = arith.constant dense<0.000000e+00> : vector<128x128xf32>
      %25 = tpu.matmul %19, %24, %cst_16 {dimension_numbers = #tpu.dot_dimension_numbers<[1], [0], [0], [1], [0, 0, 1, 1], [], []>} : vector<128x128xf32>, vector<128x128xf32>, vector<128x128xf32> -> vector<128x128xf32>
      %c0_17 = arith.constant 0 : index
      %c0_18 = arith.constant 0 : index
      %26 = vector.load %arg6[%c0_17, %c0_18] : memref<128x128xf32, #tpu.memory_space<vmem>>, vector<128x128xf32>
      %cst_19 = arith.constant dense<0.000000e+00> : vector<128x128xf32>
      %27 = tpu.matmul %23, %26, %cst_19 {dimension_numbers = #tpu.dot_dimension_numbers<[1], [0], [0], [1], [0, 0, 1, 1], [], []>} : vector<128x128xf32>, vector<128x128xf32>, vector<128x128xf32> -> vector<128x128xf32>
      %28 = arith.addf %25, %27 : vector<128x128xf32>
      %c0_20 = arith.constant 0 : index
      %c0_21 = arith.constant 0 : index
      %29 = vector.load %arg7[%c0_20, %c0_21] : memref<1x128xf32, #tpu.memory_space<vmem>>, vector<1x128xf32>
      %30 = vector.broadcast %29 : vector<1x128xf32> to vector<128x128xf32>
      %31 = arith.addf %28, %30 : vector<128x128xf32>
      %32 = arith.mulf %31, %31 : vector<128x128xf32>
      %cst_22 = arith.constant dense<0.000000e+00> : vector<128xf32>
      %33 = vector.multi_reduction <add>, %32, %cst_22 [1] : vector<128x128xf32> to vector<128xf32>
      %34 = vector.shape_cast %33 : vector<128xf32> to vector<128x1xf32>
      %cst_23 = arith.constant 1.000000e-24 : f32
      %35 = vector.broadcast %cst_23 : f32 to vector<128x1xf32>
      %36 = arith.maximumf %34, %35 : vector<128x1xf32>
      %37 = math.rsqrt %36 : vector<128x1xf32>
      %38 = vector.broadcast %37 : vector<128x1xf32> to vector<128x128xf32>
      %39 = arith.mulf %31, %38 : vector<128x128xf32>
      %cst_24 = arith.constant 0.000000e+00 : f32
      %40 = vector.broadcast %cst_24 : f32 to vector<128x128xf32>
      %41 = arith.maximumf %39, %40 : vector<128x128xf32>
      %c0_25 = arith.constant 0 : index
      %c0_26 = arith.constant 0 : index
      %42 = vector.load %arg8[%c0_25, %c0_26] : memref<128x128xf32, #tpu.memory_space<vmem>>, vector<128x128xf32>
      %cst_27 = arith.constant dense<0.000000e+00> : vector<128x128xf32>
      %43 = tpu.matmul %41, %42, %cst_27 {dimension_numbers = #tpu.dot_dimension_numbers<[1], [0], [0], [1], [0, 0, 1, 1], [], []>} : vector<128x128xf32>, vector<128x128xf32>, vector<128x128xf32> -> vector<128x128xf32>
      %c0_28 = arith.constant 0 : index
      %c0_29 = arith.constant 0 : index
      %44 = vector.load %arg11[%c0_28, %c0_29] : memref<128x128xf32, #tpu.memory_space<vmem>>, vector<128x128xf32>
      tpu.vector_store %arg11[%c0_28, %c0_29], %43 {strides = array<i32>} : memref<128x128xf32, #tpu.memory_space<vmem>>, vector<128x128xf32>,
      %c0_30 = arith.constant 0 : index
      %c0_31 = arith.constant 0 : index
      %45 = vector.load %arg9[%c0_30, %c0_31] : memref<128x128xf32, #tpu.memory_space<vmem>>, vector<128x128xf32>
      %cst_32 = arith.constant dense<0.000000e+00> : vector<128x128xf32>
      %46 = tpu.matmul %41, %45, %cst_32 {dimension_numbers = #tpu.dot_dimension_numbers<[1], [0], [0], [1], [0, 0, 1, 1], [], []>} : vector<128x128xf32>, vector<128x128xf32>, vector<128x128xf32> -> vector<128x128xf32>
      %c0_33 = arith.constant 0 : index
      %c0_34 = arith.constant 0 : index
      %47 = vector.load %arg10[%c0_33, %c0_34] : memref<1x128xf32, #tpu.memory_space<vmem>>, vector<1x128xf32>
      %48 = vector.broadcast %47 : vector<1x128xf32> to vector<128x128xf32>
      %49 = arith.addf %46, %48 : vector<128x128xf32>
      %c0_35 = arith.constant 0 : index
      %c0_36 = arith.constant 0 : index
      %50 = vector.load %arg12[%c0_35, %c0_36] : memref<128x128xf32, #tpu.memory_space<vmem>>, vector<128x128xf32>
      tpu.vector_store %arg12[%c0_35, %c0_36], %49 {strides = array<i32>} : memref<128x128xf32, #tpu.memory_space<vmem>>, vector<128x128xf32>,
    } else {
    }
    return
  }
  func.func @transform_0(%arg0: i32, %arg1: i32) -> (i32, i32) {
    %c0_i32 = arith.constant 0 : i32
    return %arg0, %arg1 : i32, i32
  }
  func.func @transform_1(%arg0: i32, %arg1: i32) -> (i32, i32) {
    %c0_i32 = arith.constant 0 : i32
    %c0_i32_0 = arith.constant 0 : i32
    %c0_i32_1 = arith.constant 0 : i32
    return %c0_i32, %c0_i32_0 : i32, i32
  }
  func.func @transform_2(%arg0: i32, %arg1: i32) -> (i32, i32) {
    %c0_i32 = arith.constant 0 : i32
    %c0_i32_0 = arith.constant 0 : i32
    return %arg0, %c0_i32 : i32, i32
  }
  func.func @transform_3(%arg0: i32, %arg1: i32) -> (i32, i32) {
    %c0_i32 = arith.constant 0 : i32
    %c0_i32_0 = arith.constant 0 : i32
    %c0_i32_1 = arith.constant 0 : i32
    return %c0_i32, %c0_i32_0 : i32, i32
  }
  func.func @transform_4(%arg0: i32, %arg1: i32) -> (i32, i32) {
    %c0_i32 = arith.constant 0 : i32
    %c0_i32_0 = arith.constant 0 : i32
    %c0_i32_1 = arith.constant 0 : i32
    return %c0_i32, %c0_i32_0 : i32, i32
  }
  func.func @transform_5(%arg0: i32, %arg1: i32) -> (i32, i32) {
    %c0_i32 = arith.constant 0 : i32
    %c0_i32_0 = arith.constant 0 : i32
    %c0_i32_1 = arith.constant 0 : i32
    return %c0_i32, %c0_i32_0 : i32, i32
  }
  func.func @transform_6(%arg0: i32, %arg1: i32) -> (i32, i32) {
    %c0_i32 = arith.constant 0 : i32
    %c0_i32_0 = arith.constant 0 : i32
    %c0_i32_1 = arith.constant 0 : i32
    return %c0_i32, %c0_i32_0 : i32, i32
  }
  func.func @transform_7(%arg0: i32, %arg1: i32) -> (i32, i32) {
    %c0_i32 = arith.constant 0 : i32
    %c0_i32_0 = arith.constant 0 : i32
    %c0_i32_1 = arith.constant 0 : i32
    return %c0_i32, %c0_i32_0 : i32, i32
  }
  func.func @transform_8(%arg0: i32, %arg1: i32) -> (i32, i32) {
    %c0_i32 = arith.constant 0 : i32
    %c0_i32_0 = arith.constant 0 : i32
    %c0_i32_1 = arith.constant 0 : i32
    return %c0_i32, %c0_i32_0 : i32, i32
  }
  func.func @transform_9(%arg0: i32, %arg1: i32) -> (i32, i32) {
    %c0_i32 = arith.constant 0 : i32
    %c0_i32_0 = arith.constant 0 : i32
    return %arg0, %c0_i32 : i32, i32
  }
  func.func @transform_10(%arg0: i32, %arg1: i32) -> (i32, i32) {
    %c0_i32 = arith.constant 0 : i32
    %c0_i32_0 = arith.constant 0 : i32
    return %arg0, %c0_i32 : i32, i32
  }
}

</mosaic_0001>

<llo_original>
// kernel: tpu_custom_call.1
$region0: #{tpu_custom_call.1}
  #allocation0 [shape = 'u32[]', space=smem, size = 0x4, offset = 0x4, fixed_abs, tag = 'smem constant byte address 0x4 - core index']
  #allocation1 [shape = 'u32[144,128]{1,0:T(1,128)}', space=vmem, size = 0x12000, scoped, tag = 'internal scratch']
  #allocation2 [shape = 'f32[128,128]{1,0:T(8,128)}', space=vmem, size = 0x10000, scoped, tag = 'scratch operand']
  %s0 = inlined_call_operand.vmem [shape: bf16[256,256], index: 0, kind: input, shape index: {}]
  %s1 = inlined_call_operand.hbm [shape: f32[256,128], index: 1, kind: input, shape index: {}]
  %s2 = inlined_call_operand.vmem [shape: f32[256,1], index: 2, kind: input, shape index: {}]
  %s3 = inlined_call_operand.hbm [shape: f32[128,128], index: 3, kind: input, shape index: {}]
  %s4 = inlined_call_operand.hbm [shape: f32[128,128], index: 4, kind: input, shape index: {}]
  %s5 = inlined_call_operand.vmem [shape: f32[1,128], index: 5, kind: input, shape index: {}]
  %s6 = inlined_call_operand.hbm [shape: f32[128,128], index: 6, kind: input, shape index: {}]
  %s7 = inlined_call_operand.hbm [shape: f32[128,128], index: 7, kind: input, shape index: {}]
  %s8 = inlined_call_operand.vmem [shape: f32[1,128], index: 8, kind: input, shape index: {}]
  %s9 = inlined_call_operand.hbm [shape: f32[256,128], index: 9, kind: output, shape index: {0}]
  %s10 = inlined_call_operand.hbm [shape: f32[256,128], index: 10, kind: output, shape index: {1}]
  %11 = xla_tuple %s9, %s10
  %s12 = sld [smem:[#allocation0]]
  $region146: #{tpu_custom_call.1} parent=0
    _
  %s14 = ssub.s32 1, %s12
  %s15 = scalar_select 0, %s14, %s12
  $region1: #{tpu_custom_call.1} parent=0
    #allocation3 [shape = 'u8[65536]{0}', space=vmem, size = 0x10000, scoped, tag = 'input window, operand 0']
    #allocation4 [shape = 'u8[131072]{0}', space=vmem, size = 0x20000, scoped, tag = 'input window, operand 1, single buffered']
    #allocation5 [shape = 's32[2]{0}', space=sflag, size = 0x8, scoped, tag = 'scoped memory for tpu_custom_call.1']
    #allocation6 [shape = 's32[2]{0}', space=sflag, size = 0x8, scoped, tag = 'scoped memory for tpu_custom_call.1']
    #allocation7 [shape = 'u8[65536]{0}', space=vmem, size = 0x10000, scoped, tag = 'input window, operand 3, single buffered']
    #allocation8 [shape = 's32[1]{0}', space=sflag, size = 0x4, scoped, tag = 'scoped memory for tpu_custom_call.1']
    #allocation9 [shape = 'u8[65536]{0}', space=vmem, size = 0x10000, scoped, tag = 'input window, operand 4, single buffered']
    #allocation10 [shape = 'u8[65536]{0}', space=vmem, size = 0x10000, scoped, tag = 'input window, operand 6, single buffered']
    #allocation11 [shape = 's32[1]{0}', space=sflag, size = 0x4, scoped, tag = 'scoped memory for tpu_custom_call.1']
    #allocation12 [shape = 'u8[65536]{0}', space=vmem, size = 0x10000, scoped, tag = 'input window, operand 7, single buffered']
    #allocation13 [shape = 'u8[131072]{0}', space=vmem, size = 0x20000, scoped, tag = 'output window, operand 0']
    #allocation14 [shape = 'u8[131072]{0}', space=vmem, size = 0x20000, scoped, tag = 'output window, operand 1']
    #allocation15 [shape = 's32[2]{0}', space=sflag, size = 0x8, scoped, tag = 'scoped memory for tpu_custom_call.1']
    %16 = vsyncpa [#allocation5], 0
    %17 = vsyncpa [#allocation8], 0
    %18 = vsyncpa [#allocation11], 0
    %19 = vsyncpa [#allocation6], 0
    %s20 = scalar_lea.sflag [#allocation6], 1
    %21 = vsyncpa %s20, 0
    %22 = vsyncpa [#allocation15], 0
    %s23 = scalar_lea.sflag [#allocation15], 1
    %24 = vsyncpa %s23, 0
    loop: start=0, step=1, limit=6
    $region2: #{tpu_custom_call.1} parent=1 // loop_pre_header
      _
    $region3: #{tpu_custom_call.1} parent=1 // loop_header
      %s26 = sphi 0, %s30
      %p27 = scmp.ge.s32.totalorder %s26, 6
      %s33 = sphi 0, %s45
      %s34 = sphi 0, %s41
      %s35 = sphi 0, %s33
      %s36 = sphi 0, %s34
      %s37 = sphi 0, %s35
      %s38 = sphi 0, %s36
      %s50 = sphi 0, %s52
      %s53 = sphi 0, %s50
      %s54 = sphi 0, %s53
      %s70 = sphi 0, %s54
      %s74 = sphi 0, %s74
      %s76 = sphi 0, %s74
      %s77 = sphi 0, %s76
      %s91 = sphi 0, %s77
      %s97 = sphi 0, %s99
      %s100 = sphi 0, %s97
      %s101 = sphi 0, %s100
      %s117 = sphi 0, %s101
      %s121 = sphi 0, %s121
      %s123 = sphi 0, %s121
      %s124 = sphi 0, %s123
      %s138 = sphi 0, %s124
      %s142 = sphi 0, %s142
      %s144 = sphi 0, %s142
      %s145 = sphi 0, %s144
      %s159 = sphi 0, %s145
      %s163 = sphi 0, %s163
      %s165 = sphi 0, %s163
      %s166 = sphi 0, %s165
      %s180 = sphi 0, %s166
      %s184 = sphi 0, %s184
      %s186 = sphi 0, %s184
      %s187 = sphi 0, %s186
      %s201 = sphi 0, %s187
      %s205 = sphi 0, %s205
      %s207 = sphi 0, %s205
      %s208 = sphi 0, %s207
      %s222 = sphi 0, %s208
      %s226 = sphi 0, %s226
      %s228 = sphi 0, %s226
      %s229 = sphi 0, %s228
      %s243 = sphi 0, %s229
      %s249 = sphi 0, %s251
      %s252 = sphi 0, %s249
      %s253 = sphi 0, %s252
      %s269 = sphi 0, %s253
      %s275 = sphi 0, %s277
      %s278 = sphi 0, %s275
      %s279 = sphi 0, %s278
      %s295 = sphi 0, %s279
    $region4: #{tpu_custom_call.1} parent=1 // loop_header_branch
      %29 = sbr.rel (%p27) target = $region8
    $region5: #{tpu_custom_call.1} parent=1 // loop_body
      %s31 = ssub.s32 %s26, 1
      %s32 = ssub.s32 %s26, 2
      %s39 = sadd.s32 1, %s34
      %p40 = scmp.ge.s32.totalorder %s39, 2
      %s41 = scalar_select %p40, 0, %s39
      %s42 = sadd.s32 1, %s33
      %s43 = scalar_select %p40, %s42, %s33
      %p44 = scmp.ge.s32.totalorder %s43, 2
      %s45 = scalar_select %p44, 0, %s43
      %s46 = ssub.s32 %s33, %s45
      %s47 = ssub.s32 %s34, %s41
      %s48 = sor.u32 %s46, %s47
      %p49 = scmp.eq.s32.totalorder %s48, 0
      %s51 = sadd.s32 %s50, 1
      %s52 = scalar_select %p49, %s50, %s51
      %p55 = pneg %p49
      %p56 = scmp.eq.s32.totalorder %s26, 3
      %p57 = por %p55, %p56
      %p58 = scmp.ne.s32.totalorder %s50, %s53
      %p59 = scmp.eq.s32.totalorder %s26, 0
      %p60 = por %p58, %p59
      %p61 = scmp.ne.s32.totalorder %s50, %s53
      %p62 = scmp.eq.s32.totalorder %s31, 3
      %p63 = por %p61, %p62
      %p64 = scmp.ne.s32.totalorder %s53, %s54
      %p65 = scmp.eq.s32.totalorder %s31, 0
      %p66 = por %p64, %p65
      %p67 = scmp.ne.s32.totalorder %s53, %s54
      %p68 = scmp.eq.s32.totalorder %s32, 3
      %p69 = por %p67, %p68
      %p71 = scmp.ne.s32.totalorder %s54, %s70
      %p72 = scmp.eq.s32.totalorder %s32, 0
      %p73 = por %p71, %p72
      %s75 = sadd.s32 %s74, 1
      %p78 = scmp.eq.s32.totalorder %s26, 3
      %p79 = scmp.ne.s32.totalorder %s74, %s76
      %p80 = scmp.eq.s32.totalorder %s26, 0
      %p81 = por %p79, %p80
      %p82 = scmp.ne.s32.totalorder %s74, %s76
      %p83 = scmp.eq.s32.totalorder %s31, 3
      %p84 = por %p82, %p83
      %p85 = scmp.ne.s32.totalorder %s76, %s77
      %p86 = scmp.eq.s32.totalorder %s31, 0
      %p87 = por %p85, %p86
      %p88 = scmp.ne.s32.totalorder %s76, %s77
      %p89 = scmp.eq.s32.totalorder %s32, 3
      %p90 = por %p88, %p89
      %p92 = scmp.ne.s32.totalorder %s77, %s91
      %p93 = scmp.eq.s32.totalorder %s32, 0
      %p94 = por %p92, %p93
      %s95 = ssub.s32 %s33, %s45
      %p96 = scmp.eq.s32.totalorder %s95, 0
      %s98 = sadd.s32 %s97, 1
      %s99 = scalar_select %p96, %s97, %s98
      %p102 = pneg %p96
      %p103 = scmp.eq.s32.totalorder %s26, 3
      %p104 = por %p102, %p103
      %p105 = scmp.ne.s32.totalorder %s97, %s100
      %p106 = scmp.eq.s32.totalorder %s26, 0
      %p107 = por %p105, %p106
      %p108 = scmp.ne.s32.totalorder %s97, %s100
      %p109 = scmp.eq.s32.totalorder %s31, 3
      %p110 = por %p108, %p109
      %p111 = scmp.ne.s32.totalorder %s100, %s101
      %p112 = scmp.eq.s32.totalorder %s31, 0
      %p113 = por %p111, %p112
      %p114 = scmp.ne.s32.totalorder %s100, %s101
      %p115 = scmp.eq.s32.totalorder %s32, 3
      %p116 = por %p114, %p115
      %p118 = scmp.ne.s32.totalorder %s101, %s117
      %p119 = scmp.eq.s32.totalorder %s32, 0
      %p120 = por %p118, %p119
      %s122 = sadd.s32 %s121, 1
      %p125 = scmp.eq.s32.totalorder %s26, 3
      %p126 = scmp.ne.s32.totalorder %s121, %s123
      %p127 = scmp.eq.s32.totalorder %s26, 0
      %p128 = por %p126, %p127
      %p129 = scmp.ne.s32.totalorder %s121, %s123
      %p130 = scmp.eq.s32.totalorder %s31, 3
      %p131 = por %p129, %p130
      %p132 = scmp.ne.s32.totalorder %s123, %s124
      %p133 = scmp.eq.s32.totalorder %s31, 0
      %p134 = por %p132, %p133
      %p135 = scmp.ne.s32.totalorder %s123, %s124
      %p136 = scmp.eq.s32.totalorder %s32, 3
      %p137 = por %p135, %p136
      %p139 = scmp.ne.s32.totalorder %s124, %s138
      %p140 = scmp.eq.s32.totalorder %s32, 0
      %p141 = por %p139, %p140
      %s143 = sadd.s32 %s142, 1
      %p146 = scmp.eq.s32.totalorder %s26, 3
      %p147 = scmp.ne.s32.totalorder %s142, %s144
      %p148 = scmp.eq.s32.totalorder %s26, 0
      %p149 = por %p147, %p148
      %p150 = scmp.ne.s32.totalorder %s142, %s144
      %p151 = scmp.eq.s32.totalorder %s31, 3
      %p152 = por %p150, %p151
      %p153 = scmp.ne.s32.totalorder %s144, %s145
      %p154 = scmp.eq.s32.totalorder %s31, 0
      %p155 = por %p153, %p154
      %p156 = scmp.ne.s32.totalorder %s144, %s145
      %p157 = scmp.eq.s32.totalorder %s32, 3
      %p158 = por %p156, %p157
      %p160 = scmp.ne.s32.totalorder %s145, %s159
      %p161 = scmp.eq.s32.totalorder %s32, 0
      %p162 = por %p160, %p161
      %s164 = sadd.s32 %s163, 1
      %p167 = scmp.eq.s32.totalorder %s26, 3
      %p168 = scmp.ne.s32.totalorder %s163, %s165
      %p169 = scmp.eq.s32.totalorder %s26, 0
      %p170 = por %p168, %p169
      %p171 = scmp.ne.s32.totalorder %s163, %s165
      %p172 = scmp.eq.s32.totalorder %s31, 3
      %p173 = por %p171, %p172
      %p174 = scmp.ne.s32.totalorder %s165, %s166
      %p175 = scmp.eq.s32.totalorder %s31, 0
      %p176 = por %p174, %p175
      %p177 = scmp.ne.s32.totalorder %s165, %s166
      %p178 = scmp.eq.s32.totalorder %s32, 3
      %p179 = por %p177, %p178
      %p181 = scmp.ne.s32.totalorder %s166, %s180
      %p182 = scmp.eq.s32.totalorder %s32, 0
      %p183 = por %p181, %p182
      %s185 = sadd.s32 %s184, 1
      %p188 = scmp.eq.s32.totalorder %s26, 3
      %p189 = scmp.ne.s32.totalorder %s184, %s186
      %p190 = scmp.eq.s32.totalorder %s26, 0
      %p191 = por %p189, %p190
      %p192 = scmp.ne.s32.totalorder %s184, %s186
      %p193 = scmp.eq.s32.totalorder %s31, 3
      %p194 = por %p192, %p193
      %p195 = scmp.ne.s32.totalorder %s186, %s187
      %p196 = scmp.eq.s32.totalorder %s31, 0
      %p197 = por %p195, %p196
      %p198 = scmp.ne.s32.totalorder %s186, %s187
      %p199 = scmp.eq.s32.totalorder %s32, 3
      %p200 = por %p198, %p199
      %p202 = scmp.ne.s32.totalorder %s187, %s201
      %p203 = scmp.eq.s32.totalorder %s32, 0
      %p204 = por %p202, %p203
      %s206 = sadd.s32 %s205, 1
      %p209 = scmp.eq.s32.totalorder %s26, 3
      %p210 = scmp.ne.s32.totalorder %s205, %s207
      %p211 = scmp.eq.s32.totalorder %s26, 0
      %p212 = por %p210, %p211
      %p213 = scmp.ne.s32.totalorder %s205, %s207
      %p214 = scmp.eq.s32.totalorder %s31, 3
      %p215 = por %p213, %p214
      %p216 = scmp.ne.s32.totalorder %s207, %s208
      %p217 = scmp.eq.s32.totalorder %s31, 0
      %p218 = por %p216, %p217
      %p219 = scmp.ne.s32.totalorder %s207, %s208
      %p220 = scmp.eq.s32.totalorder %s32, 3
      %p221 = por %p219, %p220
      %p223 = scmp.ne.s32.totalorder %s208, %s222
      %p224 = scmp.eq.s32.totalorder %s32, 0
      %p225 = por %p223, %p224
      %s227 = sadd.s32 %s226, 1
      %p230 = scmp.eq.s32.totalorder %s26, 3
      %p231 = scmp.ne.s32.totalorder %s226, %s228
      %p232 = scmp.eq.s32.totalorder %s26, 0
      %p233 = por %p231, %p232
      %p234 = scmp.ne.s32.totalorder %s226, %s228
      %p235 = scmp.eq.s32.totalorder %s31, 3
      %p236 = por %p234, %p235
      %p237 = scmp.ne.s32.totalorder %s228, %s229
      %p238 = scmp.eq.s32.totalorder %s31, 0
      %p239 = por %p237, %p238
      %p240 = scmp.ne.s32.totalorder %s228, %s229
      %p241 = scmp.eq.s32.totalorder %s32, 3
      %p242 = por %p240, %p241
      %p244 = scmp.ne.s32.totalorder %s229, %s243
      %p245 = scmp.eq.s32.totalorder %s32, 0
      %p246 = por %p244, %p245
      %s247 = ssub.s32 %s33, %s45
      %p248 = scmp.eq.s32.totalorder %s247, 0
      %s250 = sadd.s32 %s249, 1
      %s251 = scalar_select %p248, %s249, %s250
      %p254 = pneg %p248
      %p255 = scmp.eq.s32.totalorder %s26, 3
      %p256 = por %p254, %p255
      %p257 = scmp.ne.s32.totalorder %s249, %s252
      %p258 = scmp.eq.s32.totalorder %s26, 0
      %p259 = por %p257, %p258
      %p260 = scmp.ne.s32.totalorder %s249, %s252
      %p261 = scmp.eq.s32.totalorder %s31, 3
      %p262 = por %p260, %p261
      %p263 = scmp.ne.s32.totalorder %s252, %s253
      %p264 = scmp.eq.s32.totalorder %s31, 0
      %p265 = por %p263, %p264
      %p266 = scmp.ne.s32.totalorder %s252, %s253
      %p267 = scmp.eq.s32.totalorder %s32, 3
      %p268 = por %p266, %p267
      %p270 = scmp.ne.s32.totalorder %s253, %s269
      %p271 = scmp.eq.s32.totalorder %s32, 0
      %p272 = por %p270, %p271
      %s273 = ssub.s32 %s33, %s45
      %p274 = scmp.eq.s32.totalorder %s273, 0
      %s276 = sadd.s32 %s275, 1
      %s277 = scalar_select %p274, %s275, %s276
      %p280 = pneg %p274
      %p281 = scmp.eq.s32.totalorder %s26, 3
      %p282 = por %p280, %p281
      %p283 = scmp.ne.s32.totalorder %s275, %s278
      %p284 = scmp.eq.s32.totalorder %s26, 0
      %p285 = por %p283, %p284
      %p286 = scmp.ne.s32.totalorder %s275, %s278
      %p287 = scmp.eq.s32.totalorder %s31, 3
      %p288 = por %p286, %p287
      %p289 = scmp.ne.s32.totalorder %s278, %s279
      %p290 = scmp.eq.s32.totalorder %s31, 0
      %p291 = por %p289, %p290
      %p292 = scmp.ne.s32.totalorder %s278, %s279
      %p293 = scmp.eq.s32.totalorder %s32, 3
      %p294 = por %p292, %p293
      %p296 = scmp.ne.s32.totalorder %s279, %s295
      %p297 = scmp.eq.s32.totalorder %s32, 0
      %p298 = por %p296, %p297
      %p299 = scmp.le.s32.totalorder 1, %s26
      %p300 = scmp.lt.s32.totalorder %s26, 5
      %p301 = pnand %p299, %p300
      %p302 = pneg %p301
      // Predicated region
      $region9: #{tpu_custom_call.1} parent=5 // pred_check
        _
      $region10: #{tpu_custom_call.1} parent=5 // pred_check_branch
        %304 = sbr.rel (%p301) target = $region12
      $region11: #{tpu_custom_call.1} parent=5 // pred_region
        %s305 = ssub.s32 %s26, 1
        // Predicated region
        $region13: #{tpu_custom_call.1} parent=11 // pred_check
          %p306 = pneg %p87
        $region14: #{tpu_custom_call.1} parent=11 // pred_check_branch
          %308 = sbr.rel (%p306) target = $region16
        $region15: #{tpu_custom_call.1} parent=11 // pred_region
          %s310 = ssub.s32 4096, 4096
          %311 = vsyncadd [#allocation5], %s310
          %s312 = sshll.u32 [#allocation4], 4
          %s313 = int_to_ptr.vmem [resolvable:$true] %s312
          %318 = dma.hbm_to_vmem [thread:$0]  %s1, 4096, %s313, [#allocation5], 128, 128, 8
        $region16: #{tpu_custom_call.1} parent=11 // pred_fallthru
          _
        // Predicated region
        $region17: #{tpu_custom_call.1} parent=11 // pred_check
          %p319 = pneg %p134
        $region18: #{tpu_custom_call.1} parent=11 // pred_check_branch
          %321 = sbr.rel (%p319) target = $region20
        $region19: #{tpu_custom_call.1} parent=11 // pred_region
          %s323 = ssub.s32 2048, 2048
          %324 = vsyncadd [#allocation8], %s323
          %s325 = sshll.u32 [#allocation7], 4
          %s326 = int_to_ptr.vmem [resolvable:$true] %s325
          %331 = dma.hbm_to_vmem [thread:$0]  %s3, 2048, %s326, [#allocation8], 128, 128, 8
        $region20: #{tpu_custom_call.1} parent=11 // pred_fallthru
          _
        // Predicated region
        $region21: #{tpu_custom_call.1} parent=11 // pred_check
          %p332 = pneg %p155
        $region22: #{tpu_custom_call.1} parent=11 // pred_check_branch
          %334 = sbr.rel (%p332) target = $region24
        $region23: #{tpu_custom_call.1} parent=11 // pred_region
          %s336 = ssub.s32 2048, 2048
          %337 = vsyncadd [#allocation8], %s336
          %s338 = sshll.u32 [#allocation9], 4
          %s339 = int_to_ptr.vmem [resolvable:$true] %s338
          %344 = dma.hbm_to_vmem [thread:$0]  %s4, 2048, %s339, [#allocation8], 128, 128, 8
        $region24: #{tpu_custom_call.1} parent=11 // pred_fallthru
          _
        // Predicated region
        $region25: #{tpu_custom_call.1} parent=11 // pred_check
          %p345 = pneg %p176
        $region26: #{tpu_custom_call.1} parent=11 // pred_check_branch
          %347 = sbr.rel (%p345) target = $region28
        $region27: #{tpu_custom_call.1} parent=11 // pred_region
          _
        $region28: #{tpu_custom_call.1} parent=11 // pred_fallthru
          _
        // Predicated region
        $region29: #{tpu_custom_call.1} parent=11 // pred_check
          %p348 = pneg %p197
        $region30: #{tpu_custom_call.1} parent=11 // pred_check_branch
          %350 = sbr.rel (%p348) target = $region32
        $region31: #{tpu_custom_call.1} parent=11 // pred_region
          %s352 = ssub.s32 2048, 2048
          %353 = vsyncadd [#allocation11], %s352
          %s354 = sshll.u32 [#allocation10], 4
          %s355 = int_to_ptr.vmem [resolvable:$true] %s354
          %360 = dma.hbm_to_vmem [thread:$0]  %s6, 2048, %s355, [#allocation11], 128, 128, 8
        $region32: #{tpu_custom_call.1} parent=11 // pred_fallthru
          _
        // Predicated region
        $region33: #{tpu_custom_call.1} parent=11 // pred_check
          %p361 = pneg %p218
        $region34: #{tpu_custom_call.1} parent=11 // pred_check_branch
          %363 = sbr.rel (%p361) target = $region36
        $region35: #{tpu_custom_call.1} parent=11 // pred_region
          %s365 = ssub.s32 2048, 2048
          %366 = vsyncadd [#allocation11], %s365
          %s367 = sshll.u32 [#allocation12], 4
          %s368 = int_to_ptr.vmem [resolvable:$true] %s367
          %373 = dma.hbm_to_vmem [thread:$0]  %s7, 2048, %s368, [#allocation11], 128, 128, 8
        $region36: #{tpu_custom_call.1} parent=11 // pred_fallthru
          _
        // Predicated region
        $region37: #{tpu_custom_call.1} parent=11 // pred_check
          %p374 = pneg %p239
        $region38: #{tpu_custom_call.1} parent=11 // pred_check_branch
          %376 = sbr.rel (%p374) target = $region40
        $region39: #{tpu_custom_call.1} parent=11 // pred_region
          _
        $region40: #{tpu_custom_call.1} parent=11 // pred_fallthru
          _
      $region12: #{tpu_custom_call.1} parent=5 // pred_fallthru
        _
      %p377 = scmp.lt.s32.totalorder %s26, 4
      // Predicated region
      $region41: #{tpu_custom_call.1} parent=5 // pred_check
        %p378 = pneg %p377
      $region42: #{tpu_custom_call.1} parent=5 // pred_check_branch
        %380 = sbr.rel (%p378) target = $region44
      $region43: #{tpu_custom_call.1} parent=5 // pred_region
        // Predicated region
        $region45: #{tpu_custom_call.1} parent=43 // pred_check
          %p381 = pneg %p60
        $region46: #{tpu_custom_call.1} parent=43 // pred_check_branch
          %383 = sbr.rel (%p381) target = $region48
        $region47: #{tpu_custom_call.1} parent=43 // pred_region
          %s384 = sand.u32 %s50, 1
          %s385 = sand.u32 %s50, 1
          %s386 = smul.addr %s385, 64
          %s387 = scalar_lea.vmem [#allocation3], %s386
          %s388 = smul.u32 16, %s33
          %s389 = smul.addr %s388, 2
          %s390 = sadd.s32 %s34, %s389
          %s391 = smul.addr %s390, 4
          %s392 = scalar_lea.vmem %s0, %s391
          // Predicated region
          $region49: #{tpu_custom_call.1} parent=47 // pred_check
            _
          $region50: #{tpu_custom_call.1} parent=47 // pred_check_branch
            %394 = sbr.rel (0) target = $region52
          $region51: #{tpu_custom_call.1} parent=47 // pred_region
            // Predicated region
            $region53: #{tpu_custom_call.1} parent=51 // pred_check
              _
            $region54: #{tpu_custom_call.1} parent=51 // pred_check_branch
              %396 = sbr.rel target = $region56
            $region55: #{tpu_custom_call.1} parent=51 // pred_region
              // Predicated region
              $region68: #{tpu_custom_call.1} parent=55 // pred_check
                _
              $region69: #{tpu_custom_call.1} parent=55 // pred_check_branch
                %441 = sbr.rel (0) target = $region71
              $region70: #{tpu_custom_call.1} parent=55 // pred_region
                loop: start=0, step=1, limit=1
                $region72: #{tpu_custom_call.1} parent=70 // loop_pre_header
                  _
                $region73: #{tpu_custom_call.1} parent=70 // loop_header
                  %s443 = sphi 0, %s447
                  %p444 = scmp.ge.s32.totalorder %s443, 1
                  %s448 = sphi %s392, %s392
                  %s449 = sphi %s387, %s387
                $region74: #{tpu_custom_call.1} parent=70 // loop_header_branch
                  %446 = sbr.rel (%p444) target = $region78
                $region75: #{tpu_custom_call.1} parent=70 // loop_body
                  _
                $region76: #{tpu_custom_call.1} parent=70 // loop_footer
                  %s447 = sadd.s32 1, %s443
                $region77: #{tpu_custom_call.1} parent=70 // loop_footer_branch
                  %442 = sbr.rel target = $region73
                $region78: #{tpu_custom_call.1} parent=70 // loop_exit
                  _
                loop: start=0, step=1, limit=1
                $region79: #{tpu_custom_call.1} parent=70 // loop_pre_header
                  _
                $region80: #{tpu_custom_call.1} parent=70 // loop_header
                  %s452 = sphi 0, %s456
                  %p453 = scmp.ge.s32.totalorder %s452, 1
                  %s457 = sphi %s392, %s392
                  %s458 = sphi %s387, %s387
                $region81: #{tpu_custom_call.1} parent=70 // loop_header_branch
                  %455 = sbr.rel (%p453) target = $region85
                $region82: #{tpu_custom_call.1} parent=70 // loop_body
                  %v459 = vld [vmem:[%s457] sm:$0xf]
                  %460 = vst [vmem:[%s458] sm:$0xf] %v459
                  %v461 = vld [vmem:[%s457 + $0x8] sm:$0xf]
                  %462 = vst [vmem:[%s458 + $0x4] sm:$0xf] %v461
                  %v463 = vld [vmem:[%s457 + $0x10] sm:$0xf]
                  %464 = vst [vmem:[%s458 + $0x8] sm:$0xf] %v463
                  %v465 = vld [vmem:[%s457 + $0x18] sm:$0xf]
                  %466 = vst [vmem:[%s458 + $0xc] sm:$0xf] %v465
                  %v467 = vld [vmem:[%s457 + $0x20] sm:$0xf]
                  %468 = vst [vmem:[%s458 + $0x10] sm:$0xf] %v467
                  %v469 = vld [vmem:[%s457 + $0x28] sm:$0xf]
                  %470 = vst [vmem:[%s458 + $0x14] sm:$0xf] %v469
                  %v471 = vld [vmem:[%s457 + $0x30] sm:$0xf]
                  %472 = vst [vmem:[%s458 + $0x18] sm:$0xf] %v471
                  %v473 = vld [vmem:[%s457 + $0x38] sm:$0xf]
                  %474 = vst [vmem:[%s458 + $0x1c] sm:$0xf] %v473
                  %v475 = vld [vmem:[%s457 + $0x40] sm:$0xf]
                  %476 = vst [vmem:[%s458 + $0x20] sm:$0xf] %v475
                  %v477 = vld [vmem:[%s457 + $0x48] sm:$0xf]
                  %478 = vst [vmem:[%s458 + $0x24] sm:$0xf] %v477
                  %v479 = vld [vmem:[%s457 + $0x50] sm:$0xf]
                  %480 = vst [vmem:[%s458 + $0x28] sm:$0xf] %v479
                  %v481 = vld [vmem:[%s457 + $0x58] sm:$0xf]
                  %482 = vst [vmem:[%s458 + $0x2c] sm:$0xf] %v481
                  %v483 = vld [vmem:[%s457 + $0x60] sm:$0xf]
                  %484 = vst [vmem:[%s458 + $0x30] sm:$0xf] %v483
                  %v485 = vld [vmem:[%s457 + $0x68] sm:$0xf]
                  %486 = vst [vmem:[%s458 + $0x34] sm:$0xf] %v485
                  %v487 = vld [vmem:[%s457 + $0x70] sm:$0xf]
                  %488 = vst [vmem:[%s458 + $0x38] sm:$0xf] %v487
                  %v489 = vld [vmem:[%s457 + $0x78] sm:$0xf]
                  %490 = vst [vmem:[%s458 + $0x3c] sm:$0xf] %v489
                $region83: #{tpu_custom_call.1} parent=70 // loop_footer
                  %s456 = sadd.s32 1, %s452
                $region84: #{tpu_custom_call.1} parent=70 // loop_footer_branch
                  %451 = sbr.rel target = $region80
                $region85: #{tpu_custom_call.1} parent=70 // loop_exit
                  _
              $region71: #{tpu_custom_call.1} parent=55 // pred_fallthru
                _
            $region56: #{tpu_custom_call.1} parent=51 // pred_fallthru
              _
            // Predicated region
            $region57: #{tpu_custom_call.1} parent=51 // pred_check
              _
            $region58: #{tpu_custom_call.1} parent=51 // pred_check_branch
              %398 = sbr.rel (0) target = $region60
            $region59: #{tpu_custom_call.1} parent=51 // pred_region
              loop: start=0, step=1, limit=1
              $region61: #{tpu_custom_call.1} parent=59 // loop_pre_header
                _
              $region62: #{tpu_custom_call.1} parent=59 // loop_header
                %s401 = sphi 0, %s405
                %p402 = scmp.ge.s32.totalorder %s401, 1
                %s406 = sphi %s392, %s392
                %s407 = sphi %s387, %s387
              $region63: #{tpu_custom_call.1} parent=59 // loop_header_branch
                %404 = sbr.rel (%p402) target = $region67
              $region64: #{tpu_custom_call.1} parent=59 // loop_body
                %v408 = vld [vmem:[%s406] sm:$0xf]
                %409 = vst [vmem:[%s407] sm:$0xf] %v408
                %v410 = vld [vmem:[%s406 + $0x8] sm:$0xf]
                %411 = vst [vmem:[%s407 + $0x4] sm:$0xf] %v410
                %v412 = vld [vmem:[%s406 + $0x10] sm:$0xf]
                %413 = vst [vmem:[%s407 + $0x8] sm:$0xf] %v412
                %v414 = vld [vmem:[%s406 + $0x18] sm:$0xf]
                %415 = vst [vmem:[%s407 + $0xc] sm:$0xf] %v414
                %v416 = vld [vmem:[%s406 + $0x20] sm:$0xf]
                %417 = vst [vmem:[%s407 + $0x10] sm:$0xf] %v416
                %v418 = vld [vmem:[%s406 + $0x28] sm:$0xf]
                %419 = vst [vmem:[%s407 + $0x14] sm:$0xf] %v418
                %v420 = vld [vmem:[%s406 + $0x30] sm:$0xf]
                %421 = vst [vmem:[%s407 + $0x18] sm:$0xf] %v420
                %v422 = vld [vmem:[%s406 + $0x38] sm:$0xf]
                %423 = vst [vmem:[%s407 + $0x1c] sm:$0xf] %v422
                %v424 = vld [vmem:[%s406 + $0x40] sm:$0xf]
                %425 = vst [vmem:[%s407 + $0x20] sm:$0xf] %v424
                %v426 = vld [vmem:[%s406 + $0x48] sm:$0xf]
                %427 = vst [vmem:[%s407 + $0x24] sm:$0xf] %v426
                %v428 = vld [vmem:[%s406 + $0x50] sm:$0xf]
                %429 = vst [vmem:[%s407 + $0x28] sm:$0xf] %v428
                %v430 = vld [vmem:[%s406 + $0x58] sm:$0xf]
                %431 = vst [vmem:[%s407 + $0x2c] sm:$0xf] %v430
                %v432 = vld [vmem:[%s406 + $0x60] sm:$0xf]
                %433 = vst [vmem:[%s407 + $0x30] sm:$0xf] %v432
                %v434 = vld [vmem:[%s406 + $0x68] sm:$0xf]
                %435 = vst [vmem:[%s407 + $0x34] sm:$0xf] %v434
                %v436 = vld [vmem:[%s406 + $0x70] sm:$0xf]
                %437 = vst [vmem:[%s407 + $0x38] sm:$0xf] %v436
                %v438 = vld [vmem:[%s406 + $0x78] sm:$0xf]
                %439 = vst [vmem:[%s407 + $0x3c] sm:$0xf] %v438
              $region65: #{tpu_custom_call.1} parent=59 // loop_footer
                %s405 = sadd.s32 1, %s401
              $region66: #{tpu_custom_call.1} parent=59 // loop_footer_branch
                %400 = sbr.rel target = $region62
              $region67: #{tpu_custom_call.1} parent=59 // loop_exit
                _
            $region60: #{tpu_custom_call.1} parent=51 // pred_fallthru
              _
          $region52: #{tpu_custom_call.1} parent=47 // pred_fallthru
            _
          %491 = vnop
        $region48: #{tpu_custom_call.1} parent=43 // pred_fallthru
          _
        // Predicated region
        $region86: #{tpu_custom_call.1} parent=43 // pred_check
          %p492 = pneg %p107
        $region87: #{tpu_custom_call.1} parent=43 // pred_check_branch
          %494 = sbr.rel (%p492) target = $region89
        $region88: #{tpu_custom_call.1} parent=43 // pred_region
          %s495 = smul.u32 16, %s33
          %p496 = scmp.lt.s32.totalorder %s495, 31
          %s497 = scalar_select %p496, %s495, 31
          %s498 = smul.addr %s497, 8
          %s499 = scalar_lea.vmem %s2, %s498
          %s500 = smul.u32 16, %s33
        $region89: #{tpu_custom_call.1} parent=43 // pred_fallthru
          _
      $region44: #{tpu_custom_call.1} parent=5 // pred_fallthru
        _
      %p501 = scmp.le.s32.totalorder 1, %s26
      %p502 = scmp.lt.s32.totalorder %s26, 5
      %p503 = pnand %p501, %p502
      %p504 = pneg %p503
      // Predicated region
      $region90: #{tpu_custom_call.1} parent=5 // pred_check
        _
      $region91: #{tpu_custom_call.1} parent=5 // pred_check_branch
        %506 = sbr.rel (%p503) target = $region93
      $region92: #{tpu_custom_call.1} parent=5 // pred_region
        %s507 = ssub.s32 %s26, 1
        %s508 = sand.u32 %s53, 1
        %s509 = sand.u32 %s53, 1
        %s510 = smul.addr %s509, 64
        %s511 = scalar_lea.vmem [#allocation3], %s510
        // Predicated region
        $region94: #{tpu_custom_call.1} parent=92 // pred_check
          %p512 = pneg %p66
        $region95: #{tpu_custom_call.1} parent=92 // pred_check_branch
          %514 = sbr.rel (%p512) target = $region97
        $region96: #{tpu_custom_call.1} parent=92 // pred_region
          _
        $region97: #{tpu_custom_call.1} parent=92 // pred_fallthru
          _
        // Predicated region
        $region98: #{tpu_custom_call.1} parent=92 // pred_check
          %p515 = pneg %p87
        $region99: #{tpu_custom_call.1} parent=92 // pred_check_branch
          %517 = sbr.rel (%p515) target = $region101
        $region100: #{tpu_custom_call.1} parent=92 // pred_region
          %518 = dma.done [#allocation5], 4096
        $region101: #{tpu_custom_call.1} parent=92 // pred_fallthru
          _
        // Predicated region
        $region102: #{tpu_custom_call.1} parent=92 // pred_check
          %p519 = pneg %p134
        $region103: #{tpu_custom_call.1} parent=92 // pred_check_branch
          %521 = sbr.rel (%p519) target = $region105
        $region104: #{tpu_custom_call.1} parent=92 // pred_region
          %522 = dma.done [#allocation8], 2048
        $region105: #{tpu_custom_call.1} parent=92 // pred_fallthru
          _
        // Predicated region
        $region106: #{tpu_custom_call.1} parent=92 // pred_check
          %p523 = pneg %p155
        $region107: #{tpu_custom_call.1} parent=92 // pred_check_branch
          %525 = sbr.rel (%p523) target = $region109
        $region108: #{tpu_custom_call.1} parent=92 // pred_region
          %526 = dma.done [#allocation8], 2048
        $region109: #{tpu_custom_call.1} parent=92 // pred_fallthru
          _
        // Predicated region
        $region110: #{tpu_custom_call.1} parent=92 // pred_check
          %p527 = pneg %p197
        $region111: #{tpu_custom_call.1} parent=92 // pred_check_branch
          %529 = sbr.rel (%p527) target = $region113
        $region112: #{tpu_custom_call.1} parent=92 // pred_region
          %530 = dma.done [#allocation11], 2048
        $region113: #{tpu_custom_call.1} parent=92 // pred_fallthru
          _
        // Predicated region
        $region114: #{tpu_custom_call.1} parent=92 // pred_check
          %p531 = pneg %p218
        $region115: #{tpu_custom_call.1} parent=92 // pred_check_branch
          %533 = sbr.rel (%p531) target = $region117
        $region116: #{tpu_custom_call.1} parent=92 // pred_region
          %534 = dma.done [#allocation11], 2048
        $region117: #{tpu_custom_call.1} parent=92 // pred_fallthru
          _
        %s535 = sand.u32 %s53, 1
        %s536 = sand.u32 %s53, 1
        %s537 = smul.addr %s536, 64
        %s538 = scalar_lea.vmem [#allocation3], %s537
        %p539 = pneg %p66
        %p540 = pneg %p63
        %p541 = pneg %p87
        %p542 = pneg %p84
        %s543 = smul.u32 16, %s35
        %p544 = scmp.lt.s32.totalorder %s543, 31
        %s545 = scalar_select %p544, %s543, 31
        %s546 = smul.addr %s545, 8
        %s547 = scalar_lea.vmem %s2, %s546
        %p548 = pneg %p113
        %p549 = pneg %p110
        %p550 = pneg %p134
        %p551 = pneg %p131
        %p552 = pneg %p155
        %p553 = pneg %p152
        %p554 = pneg %p176
        %p555 = pneg %p173
        %p556 = pneg %p197
        %p557 = pneg %p194
        %p558 = pneg %p218
        %p559 = pneg %p215
        %p560 = pneg %p239
        %p561 = pneg %p236
        %p562 = pneg %p265
        %p563 = pneg %p262
        %s564 = sand.u32 %s252, 1
        %s565 = scalar_lea.sflag [#allocation6], %s564
        %s566 = sand.u32 %s252, 1
        %s567 = smul.addr %s566, 128
        %s568 = scalar_lea.vmem [#allocation13], %s567
        %p569 = pneg %p291
        %p570 = pneg %p288
        %s571 = sand.u32 %s278, 1
        %s572 = scalar_lea.sflag [#allocation15], %s571
        %s573 = sand.u32 %s278, 1
        %s574 = smul.addr %s573, 128
        %s575 = scalar_lea.vmem [#allocation14], %s574
        %s576 = smul.u32 16, %s35
        %s577 = smul.u32 16, %s35
        %p578 = scmp.lt.s32.totalorder %s577, 31
        %s579 = scalar_select %p578, %s577, 31
        %s580 = smul.addr %s579, 8
        %s581 = scalar_lea.vmem %s2, %s580
        %s582 = smul.u32 16, %s35
        %s583 = smul.u32 16, %s35
        %s584 = smul.u32 16, %s35
        %p585 = scmp.eq.s32.totalorder %s36, 0
        // Predicated region
        $region118: #{tpu_custom_call.1} parent=92 // pred_check
          %p586 = pneg %p585
        $region119: #{tpu_custom_call.1} parent=92 // pred_check_branch
          %588 = sbr.rel (%p586) target = $region121
        $region120: #{tpu_custom_call.1} parent=92 // pred_region
          %589 = vst [vmem:[#allocation2] sm:$0xff] 0.0
          %590 = vst [vmem:[#allocation2 + $0x8] sm:$0xff] 0.0
          %591 = vst [vmem:[#allocation2 + $0x10] sm:$0xff] 0.0
          %592 = vst [vmem:[#allocation2 + $0x18] sm:$0xff] 0.0
          %593 = vst [vmem:[#allocation2 + $0x20] sm:$0xff] 0.0
          %594 = vst [vmem:[#allocation2 + $0x28] sm:$0xff] 0.0
          %595 = vst [vmem:[#allocation2 + $0x30] sm:$0xff] 0.0
          %596 = vst [vmem:[#allocation2 + $0x38] sm:$0xff] 0.0
          %597 = vst [vmem:[#allocation2 + $0x40] sm:$0xff] 0.0
          %598 = vst [vmem:[#allocation2 + $0x48] sm:$0xff] 0.0
          %599 = vst [vmem:[#allocation2 + $0x50] sm:$0xff] 0.0
          %600 = vst [vmem:[#allocation2 + $0x58] sm:$0xff] 0.0
          %601 = vst [vmem:[#allocation2 + $0x60] sm:$0xff] 0.0
          %602 = vst [vmem:[#allocation2 + $0x68] sm:$0xff] 0.0
          %603 = vst [vmem:[#allocation2 + $0x70] sm:$0xff] 0.0
          %604 = vst [vmem:[#allocation2 + $0x78] sm:$0xff] 0.0
        $region121: #{tpu_custom_call.1} parent=92 // pred_fallthru
          _
        %s605 = smul.u32 %s36, 128
        %s606 = scalar_lea.vmem [#allocation4], %s605
        %v607 = vld [vmem:[%s606] sm:$0xff]
        %v608 = vld [vmem:[%s606 + $0x8] sm:$0xff]
        %v609 = vld [vmem:[%s606 + $0x10] sm:$0xff]
        %v610 = vld [vmem:[%s606 + $0x18] sm:$0xff]
        %v611 = vld [vmem:[%s606 + $0x20] sm:$0xff]
        %v612 = vld [vmem:[%s606 + $0x28] sm:$0xff]
        %v613 = vld [vmem:[%s606 + $0x30] sm:$0xff]
        %v614 = vld [vmem:[%s606 + $0x38] sm:$0xff]
        %v615 = vld [vmem:[%s606 + $0x40] sm:$0xff]
        %v616 = vld [vmem:[%s606 + $0x48] sm:$0xff]
        %v617 = vld [vmem:[%s606 + $0x50] sm:$0xff]
        %v618 = vld [vmem:[%s606 + $0x58] sm:$0xff]
        %v619 = vld [vmem:[%s606 + $0x60] sm:$0xff]
        %v620 = vld [vmem:[%s606 + $0x68] sm:$0xff]
        %v621 = vld [vmem:[%s606 + $0x70] sm:$0xff]
        %v622 = vld [vmem:[%s606 + $0x78] sm:$0xff]
        %v623 = vld [vmem:[#allocation2] sm:$0xff]
        %v624 = vld [vmem:[#allocation2 + $0x8] sm:$0xff]
        %v625 = vld [vmem:[#allocation2 + $0x10] sm:$0xff]
        %v626 = vld [vmem:[#allocation2 + $0x18] sm:$0xff]
        %v627 = vld [vmem:[#allocation2 + $0x20] sm:$0xff]
        %v628 = vld [vmem:[#allocation2 + $0x28] sm:$0xff]
        %v629 = vld [vmem:[#allocation2 + $0x30] sm:$0xff]
        %v630 = vld [vmem:[#allocation2 + $0x38] sm:$0xff]
        %v631 = vld [vmem:[#allocation2 + $0x40] sm:$0xff]
        %v632 = vld [vmem:[#allocation2 + $0x48] sm:$0xff]
        %v633 = vld [vmem:[#allocation2 + $0x50] sm:$0xff]
        %v634 = vld [vmem:[#allocation2 + $0x58] sm:$0xff]
        %v635 = vld [vmem:[#allocation2 + $0x60] sm:$0xff]
        %v636 = vld [vmem:[#allocation2 + $0x68] sm:$0xff]
        %v637 = vld [vmem:[#allocation2 + $0x70] sm:$0xff]
        %v638 = vld [vmem:[#allocation2 + $0x78] sm:$0xff]
        %v639 = vld [vmem:[%s511] sm:$0xf]
        %v640 = vld [vmem:[%s511 + $0x4] sm:$0xf]
        %v641 = vld [vmem:[%s511 + $0x8] sm:$0xf]
        %v642 = vld [vmem:[%s511 + $0xc] sm:$0xf]
        %v643 = vld [vmem:[%s511 + $0x10] sm:$0xf]
        %v644 = vld [vmem:[%s511 + $0x14] sm:$0xf]
        %v645 = vld [vmem:[%s511 + $0x18] sm:$0xf]
        %v646 = vld [vmem:[%s511 + $0x1c] sm:$0xf]
        %v647 = vld [vmem:[%s511 + $0x20] sm:$0xf]
        %v648 = vld [vmem:[%s511 + $0x24] sm:$0xf]
        %v649 = vld [vmem:[%s511 + $0x28] sm:$0xf]
        %v650 = vld [vmem:[%s511 + $0x2c] sm:$0xf]
        %v651 = vld [vmem:[%s511 + $0x30] sm:$0xf]
        %v652 = vld [vmem:[%s511 + $0x34] sm:$0xf]
        %v653 = vld [vmem:[%s511 + $0x38] sm:$0xf]
        %v654 = vld [vmem:[%s511 + $0x3c] sm:$0xf]
        %v655 = vunpack.c.l.bf16 %v639
        %v656 = vunpack.c.l.bf16 %v640
        %v657 = vunpack.c.l.bf16 %v641
        %v658 = vunpack.c.l.bf16 %v642
        %v659 = vunpack.c.l.bf16 %v643
        %v660 = vunpack.c.l.bf16 %v644
        %v661 = vunpack.c.l.bf16 %v645
        %v662 = vunpack.c.l.bf16 %v646
        %v663 = vunpack.c.l.bf16 %v647
        %v664 = vunpack.c.l.bf16 %v648
        %v665 = vunpack.c.l.bf16 %v649
        %v666 = vunpack.c.l.bf16 %v650
        %v667 = vunpack.c.l.bf16 %v651
        %v668 = vunpack.c.l.bf16 %v652
        %v669 = vunpack.c.l.bf16 %v653
        %v670 = vunpack.c.l.bf16 %v654
        %671 = vmatprep.subr.mxu0 0.0
        %672 = vmatpush1.msra.mxu0 %v607
        %673 = vmatprep.subr.mxu0 0.0
        %674 = vmatpush1.msra.mxu0 %v608
        %675 = vmatprep.subr.mxu0 0.0
        %676 = vmatpush1.msra.mxu0 %v609
        %677 = vmatprep.subr.mxu0 0.0
        %678 = vmatpush1.msra.mxu0 %v610
        %679 = vmatprep.subr.mxu0 0.0
        %680 = vmatpush1.msra.mxu0 %v611
        %681 = vmatprep.subr.mxu0 0.0
        %682 = vmatpush1.msra.mxu0 %v612
        %683 = vmatprep.subr.mxu0 0.0
        %684 = vmatpush1.msra.mxu0 %v613
        %685 = vmatprep.subr.mxu0 0.0
        %686 = vmatpush1.msra.mxu0 %v614
        %687 = vmatprep.subr.mxu0 0.0
        %688 = vmatpush1.msra.mxu0 %v615
        %689 = vmatprep.subr.mxu0 0.0
        %690 = vmatpush1.msra.mxu0 %v616
        %691 = vmatprep.subr.mxu0 0.0
        %692 = vmatpush1.msra.mxu0 %v617
        %693 = vmatprep.subr.mxu0 0.0
        %694 = vmatpush1.msra.mxu0 %v618
        %695 = vmatprep.subr.mxu0 0.0
        %696 = vmatpush1.msra.mxu0 %v619
        %697 = vmatprep.subr.mxu0 0.0
        %698 = vmatpush1.msra.mxu0 %v620
        %699 = vmatprep.subr.mxu0 0.0
        %700 = vmatpush1.msra.mxu0 %v621
        %701 = vmatprep.subr.mxu0 0.0
        %702 = vmatpush1.msra.mxu0 %v622
        %703 = vmatprep.subr.mxu0 0.0
        %704 = vmatpush1.msra.mxu0 0.0
        %705 = vmatprep.subr.mxu0 0.0
        %706 = vmatpush1.msra.mxu0 0.0
        %707 = vmatprep.subr.mxu0 0.0
        %708 = vmatpush1.msra.mxu0 0.0
        %709 = vmatprep.subr.mxu0 0.0
        %710 = vmatpush1.msra.mxu0 0.0
        %711 = vmatprep.subr.mxu0 0.0
        %712 = vmatpush1.msra.mxu0 0.0
        %713 = vmatprep.subr.mxu0 0.0
        %714 = vmatpush1.msra.mxu0 0.0
        %715 = vmatprep.subr.mxu0 0.0
        %716 = vmatpush1.msra.mxu0 0.0
        %717 = vmatprep.subr.mxu0 0.0
        %718 = vmatpush1.msra.mxu0 0.0
        %719 = vmatprep.subr.mxu0 0.0
        %720 = vmatpush1.msra.mxu0 0.0
        %721 = vmatprep.subr.mxu0 0.0
        %722 = vmatpush1.msra.mxu0 0.0
        %723 = vmatprep.subr.mxu0 0.0
        %724 = vmatpush1.msra.mxu0 0.0
        %725 = vmatprep.subr.mxu0 0.0
        %726 = vmatpush1.msra.mxu0 0.0
        %727 = vmatprep.subr.mxu0 0.0
        %728 = vmatpush1.msra.mxu0 0.0
        %729 = vmatprep.subr.mxu0 0.0
        %730 = vmatpush1.msra.mxu0 0.0
        %731 = vmatprep.subr.mxu0 0.0
        %732 = vmatpush1.msra.mxu0 0.0
        %733 = vmatprep.subr.mxu0 0.0
        %734 = vmatpush1.msra.mxu0 0.0
        %735 = vmatprep.mubr.f32.mxu0 0.0
        %736 = vmatmul.mubr.f32.gmra.mrb[0].mxu0 %v655
        %v737 = vpop.f32.mrb[0].mxu0
        %v738 = vadd.f32 0.0, %v737
        %v739 = vpop.f32.mrb[0].mxu0
        %740 = vmatprep.mubr.f32.mxu0 0.0
        %741 = vmatmul.mubr.f32.gmra.mrb[0].mxu0 %v656
        %v742 = vpop.f32.mrb[0].mxu0
        %v743 = vadd.f32 0.0, %v742
        %v744 = vpop.f32.mrb[0].mxu0
        %745 = vmatprep.mubr.f32.mxu0 0.0
        %746 = vmatmul.mubr.f32.gmra.mrb[0].mxu0 %v657
        %v747 = vpop.f32.mrb[0].mxu0
        %v748 = vadd.f32 0.0, %v747
        %v749 = vpop.f32.mrb[0].mxu0
        %750 = vmatprep.mubr.f32.mxu0 0.0
        %751 = vmatmul.mubr.f32.gmra.mrb[0].mxu0 %v658
        %v752 = vpop.f32.mrb[0].mxu0
        %v753 = vadd.f32 0.0, %v752
        %v754 = vpop.f32.mrb[0].mxu0
        %755 = vmatprep.mubr.f32.mxu0 0.0
        %756 = vmatmul.mubr.f32.gmra.mrb[0].mxu0 %v659
        %v757 = vpop.f32.mrb[0].mxu0
        %v758 = vadd.f32 0.0, %v757
        %v759 = vpop.f32.mrb[0].mxu0
        %760 = vmatprep.mubr.f32.mxu0 0.0
        %761 = vmatmul.mubr.f32.gmra.mrb[0].mxu0 %v660
        %v762 = vpop.f32.mrb[0].mxu0
        %v763 = vadd.f32 0.0, %v762
        %v764 = vpop.f32.mrb[0].mxu0
        %765 = vmatprep.mubr.f32.mxu0 0.0
        %766 = vmatmul.mubr.f32.gmra.mrb[0].mxu0 %v661
        %v767 = vpop.f32.mrb[0].mxu0
        %v768 = vadd.f32 0.0, %v767
        %v769 = vpop.f32.mrb[0].mxu0
        %770 = vmatprep.mubr.f32.mxu0 0.0
        %771 = vmatmul.mubr.f32.gmra.mrb[0].mxu0 %v662
        %v772 = vpop.f32.mrb[0].mxu0
        %v773 = vadd.f32 0.0, %v772
        %v774 = vpop.f32.mrb[0].mxu0
        %775 = vmatprep.mubr.f32.mxu0 0.0
        %776 = vmatmul.mubr.f32.gmra.mrb[0].mxu0 %v663
        %v777 = vpop.f32.mrb[0].mxu0
        %v778 = vadd.f32 0.0, %v777
        %v779 = vpop.f32.mrb[0].mxu0
        %780 = vmatprep.mubr.f32.mxu0 0.0
        %781 = vmatmul.mubr.f32.gmra.mrb[0].mxu0 %v664
        %v782 = vpop.f32.mrb[0].mxu0
        %v783 = vadd.f32 0.0, %v782
        %v784 = vpop.f32.mrb[0].mxu0
        %785 = vmatprep.mubr.f32.mxu0 0.0
        %786 = vmatmul.mubr.f32.gmra.mrb[0].mxu0 %v665
        %v787 = vpop.f32.mrb[0].mxu0
        %v788 = vadd.f32 0.0, %v787
        %v789 = vpop.f32.mrb[0].mxu0
        %790 = vmatprep.mubr.f32.mxu0 0.0
        %791 = vmatmul.mubr.f32.gmra.mrb[0].mxu0 %v666
        %v792 = vpop.f32.mrb[0].mxu0
        %v793 = vadd.f32 0.0, %v792
        %v794 = vpop.f32.mrb[0].mxu0
        %795 = vmatprep.mubr.f32.mxu0 0.0
        %796 = vmatmul.mubr.f32.gmra.mrb[0].mxu0 %v667
        %v797 = vpop.f32.mrb[0].mxu0
        %v798 = vadd.f32 0.0, %v797
        %v799 = vpop.f32.mrb[0].mxu0
        %800 = vmatprep.mubr.f32.mxu0 0.0
        %801 = vmatmul.mubr.f32.gmra.mrb[0].mxu0 %v668
        %v802 = vpop.f32.mrb[0].mxu0
        %v803 = vadd.f32 0.0, %v802
        %v804 = vpop.f32.mrb[0].mxu0
        %805 = vmatprep.mubr.f32.mxu0 0.0
        %806 = vmatmul.mubr.f32.gmra.mrb[0].mxu0 %v669
        %v807 = vpop.f32.mrb[0].mxu0
        %v808 = vadd.f32 0.0, %v807
        %v809 = vpop.f32.mrb[0].mxu0
        %810 = vmatprep.mubr.f32.mxu0 0.0
        %811 = vmatmul.mubr.f32.gmra.mrb[0].mxu0 %v670
        %v812 = vpop.f32.mrb[0].mxu0
        %v813 = vadd.f32 0.0, %v812
        %v814 = vpop.f32.mrb[0].mxu0
        %815 = vdwg.mxu0
        %v816 = vadd.f32 %v623, %v738
        %v817 = vadd.f32 %v624, %v743
        %v818 = vadd.f32 %v625, %v748
        %v819 = vadd.f32 %v626, %v753
        %v820 = vadd.f32 %v627, %v758
        %v821 = vadd.f32 %v628, %v763
        %v822 = vadd.f32 %v629, %v768
        %v823 = vadd.f32 %v630, %v773
        %v824 = vadd.f32 %v631, %v778
        %v825 = vadd.f32 %v632, %v783
        %v826 = vadd.f32 %v633, %v788
        %v827 = vadd.f32 %v634, %v793
        %v828 = vadd.f32 %v635, %v798
        %v829 = vadd.f32 %v636, %v803
        %v830 = vadd.f32 %v637, %v808
        %v831 = vadd.f32 %v638, %v813
        %832 = vst [vmem:[#allocation2] sm:$0xff] %v816
        %833 = vst [vmem:[#allocation2 + $0x8] sm:$0xff] %v817
        %834 = vst [vmem:[#allocation2 + $0x10] sm:$0xff] %v818
        %835 = vst [vmem:[#allocation2 + $0x18] sm:$0xff] %v819
        %836 = vst [vmem:[#allocation2 + $0x20] sm:$0xff] %v820
        %837 = vst [vmem:[#allocation2 + $0x28] sm:$0xff] %v821
        %838 = vst [vmem:[#allocation2 + $0x30] sm:$0xff] %v822
        %839 = vst [vmem:[#allocation2 + $0x38] sm:$0xff] %v823
        %840 = vst [vmem:[#allocation2 + $0x40] sm:$0xff] %v824
        %841 = vst [vmem:[#allocation2 + $0x48] sm:$0xff] %v825
        %842 = vst [vmem:[#allocation2 + $0x50] sm:$0xff] %v826
        %843 = vst [vmem:[#allocation2 + $0x58] sm:$0xff] %v827
        %844 = vst [vmem:[#allocation2 + $0x60] sm:$0xff] %v828
        %845 = vst [vmem:[#allocation2 + $0x68] sm:$0xff] %v829
        %846 = vst [vmem:[#allocation2 + $0x70] sm:$0xff] %v830
        %847 = vst [vmem:[#allocation2 + $0x78] sm:$0xff] %v831
        %p848 = scmp.eq.s32.totalorder %s36, 1
        // Predicated region
        $region122: #{tpu_custom_call.1} parent=92 // pred_check
          %p849 = pneg %p848
        $region123: #{tpu_custom_call.1} parent=92 // pred_check_branch
          %851 = sbr.rel (%p849) target = $region125
        $region124: #{tpu_custom_call.1} parent=92 // pred_region
          %v852 = vld [vmem:[#allocation2] sm:$0xff]
          %v853 = vld [vmem:[#allocation2 + $0x8] sm:$0xff]
          %v854 = vld [vmem:[#allocation2 + $0x10] sm:$0xff]
          %v855 = vld [vmem:[#allocation2 + $0x18] sm:$0xff]
          %v856 = vld [vmem:[#allocation2 + $0x20] sm:$0xff]
          %v857 = vld [vmem:[#allocation2 + $0x28] sm:$0xff]
          %v858 = vld [vmem:[#allocation2 + $0x30] sm:$0xff]
          %v859 = vld [vmem:[#allocation2 + $0x38] sm:$0xff]
          %v860 = vld [vmem:[#allocation2 + $0x40] sm:$0xff]
          %v861 = vld [vmem:[#allocation2 + $0x48] sm:$0xff]
          %v862 = vld [vmem:[#allocation2 + $0x50] sm:$0xff]
          %v863 = vld [vmem:[#allocation2 + $0x58] sm:$0xff]
          %v864 = vld [vmem:[#allocation2 + $0x60] sm:$0xff]
          %v865 = vld [vmem:[#allocation2 + $0x68] sm:$0xff]
          %v866 = vld [vmem:[#allocation2 + $0x70] sm:$0xff]
          %v867 = vld [vmem:[#allocation2 + $0x78] sm:$0xff]
          %v868 = vld [vmem:[%s581] sm:$0xff]
          %v869 = vld [vmem:[%s581 + $0x8] sm:$0xff]
          %v870 = vld [vmem:[%s581 + $0x10] sm:$0xff]
          %v871 = vld [vmem:[%s581 + $0x18] sm:$0xff]
          %v872 = vld [vmem:[%s581 + $0x20] sm:$0xff]
          %v873 = vld [vmem:[%s581 + $0x28] sm:$0xff]
          %v874 = vld [vmem:[%s581 + $0x30] sm:$0xff]
          %v875 = vld [vmem:[%s581 + $0x38] sm:$0xff]
          %v876 = vld [vmem:[%s581 + $0x40] sm:$0xff]
          %v877 = vld [vmem:[%s581 + $0x48] sm:$0xff]
          %v878 = vld [vmem:[%s581 + $0x50] sm:$0xff]
          %v879 = vld [vmem:[%s581 + $0x58] sm:$0xff]
          %v880 = vld [vmem:[%s581 + $0x60] sm:$0xff]
          %v881 = vld [vmem:[%s581 + $0x68] sm:$0xff]
          %v882 = vld [vmem:[%s581 + $0x70] sm:$0xff]
          %v883 = vld [vmem:[%s581 + $0x78] sm:$0xff]
          %885 = vset.pattern.permute.xlu0 0
          %886 = vperm.xlu0 %885, %v868
          %v887 = vpop.permute.xlu0 %886
          %890 = vset.pattern.permute.xlu0 0
          %891 = vperm.xlu0 %890, %v869
          %v892 = vpop.permute.xlu0 %891
          %895 = vset.pattern.permute.xlu0 0
          %896 = vperm.xlu0 %895, %v870
          %v897 = vpop.permute.xlu0 %896
          %900 = vset.pattern.permute.xlu0 0
          %901 = vperm.xlu0 %900, %v871
          %v902 = vpop.permute.xlu0 %901
          %905 = vset.pattern.permute.xlu0 0
          %906 = vperm.xlu0 %905, %v872
          %v907 = vpop.permute.xlu0 %906
          %910 = vset.pattern.permute.xlu0 0
          %911 = vperm.xlu0 %910, %v873
          %v912 = vpop.permute.xlu0 %911
          %915 = vset.pattern.permute.xlu0 0
          %916 = vperm.xlu0 %915, %v874
          %v917 = vpop.permute.xlu0 %916
          %920 = vset.pattern.permute.xlu0 0
          %921 = vperm.xlu0 %920, %v875
          %v922 = vpop.permute.xlu0 %921
          %925 = vset.pattern.permute.xlu0 0
          %926 = vperm.xlu0 %925, %v876
          %v927 = vpop.permute.xlu0 %926
          %930 = vset.pattern.permute.xlu0 0
          %931 = vperm.xlu0 %930, %v877
          %v932 = vpop.permute.xlu0 %931
          %935 = vset.pattern.permute.xlu0 0
          %936 = vperm.xlu0 %935, %v878
          %v937 = vpop.permute.xlu0 %936
          %940 = vset.pattern.permute.xlu0 0
          %941 = vperm.xlu0 %940, %v879
          %v942 = vpop.permute.xlu0 %941
          %945 = vset.pattern.permute.xlu0 0
          %946 = vperm.xlu0 %945, %v880
          %v947 = vpop.permute.xlu0 %946
          %950 = vset.pattern.permute.xlu0 0
          %951 = vperm.xlu0 %950, %v881
          %v952 = vpop.permute.xlu0 %951
          %955 = vset.pattern.permute.xlu0 0
          %956 = vperm.xlu0 %955, %v882
          %v957 = vpop.permute.xlu0 %956
          %960 = vset.pattern.permute.xlu0 0
          %961 = vperm.xlu0 %960, %v883
          %v962 = vpop.permute.xlu0 %961
          %v964 = vmul.f32 %v852, %v887
          %v965 = vmul.f32 %v853, %v892
          %v966 = vmul.f32 %v854, %v897
          %v967 = vmul.f32 %v855, %v902
          %v968 = vmul.f32 %v856, %v907
          %v969 = vmul.f32 %v857, %v912
          %v970 = vmul.f32 %v858, %v917
          %v971 = vmul.f32 %v859, %v922
          %v972 = vmul.f32 %v860, %v927
          %v973 = vmul.f32 %v861, %v932
          %v974 = vmul.f32 %v862, %v937
          %v975 = vmul.f32 %v863, %v942
          %v976 = vmul.f32 %v864, %v947
          %v977 = vmul.f32 %v865, %v952
          %v978 = vmul.f32 %v866, %v957
          %v979 = vmul.f32 %v867, %v962
          %s980 = smul.u32 %s35, 128
          %s981 = scalar_lea.vmem [#allocation4], %s980
          %v982 = vld [vmem:[%s981] sm:$0xff]
          %v983 = vld [vmem:[%s981 + $0x8] sm:$0xff]
          %v984 = vld [vmem:[%s981 + $0x10] sm:$0xff]
          %v985 = vld [vmem:[%s981 + $0x18] sm:$0xff]
          %v986 = vld [vmem:[%s981 + $0x20] sm:$0xff]
          %v987 = vld [vmem:[%s981 + $0x28] sm:$0xff]
          %v988 = vld [vmem:[%s981 + $0x30] sm:$0xff]
          %v989 = vld [vmem:[%s981 + $0x38] sm:$0xff]
          %v990 = vld [vmem:[%s981 + $0x40] sm:$0xff]
          %v991 = vld [vmem:[%s981 + $0x48] sm:$0xff]
          %v992 = vld [vmem:[%s981 + $0x50] sm:$0xff]
          %v993 = vld [vmem:[%s981 + $0x58] sm:$0xff]
          %v994 = vld [vmem:[%s981 + $0x60] sm:$0xff]
          %v995 = vld [vmem:[%s981 + $0x68] sm:$0xff]
          %v996 = vld [vmem:[%s981 + $0x70] sm:$0xff]
          %v997 = vld [vmem:[%s981 + $0x78] sm:$0xff]
          %v998 = vld [vmem:[#allocation7] sm:$0xff]
          %v999 = vld [vmem:[#allocation7 + $0x8] sm:$0xff]
          %v1000 = vld [vmem:[#allocation7 + $0x10] sm:$0xff]
          %v1001 = vld [vmem:[#allocation7 + $0x18] sm:$0xff]
          %v1002 = vld [vmem:[#allocation7 + $0x20] sm:$0xff]
          %v1003 = vld [vmem:[#allocation7 + $0x28] sm:$0xff]
          %v1004 = vld [vmem:[#allocation7 + $0x30] sm:$0xff]
          %v1005 = vld [vmem:[#allocation7 + $0x38] sm:$0xff]
          %v1006 = vld [vmem:[#allocation7 + $0x40] sm:$0xff]
          %v1007 = vld [vmem:[#allocation7 + $0x48] sm:$0xff]
          %v1008 = vld [vmem:[#allocation7 + $0x50] sm:$0xff]
          %v1009 = vld [vmem:[#allocation7 + $0x58] sm:$0xff]
          %v1010 = vld [vmem:[#allocation7 + $0x60] sm:$0xff]
          %v1011 = vld [vmem:[#allocation7 + $0x68] sm:$0xff]
          %v1012 = vld [vmem:[#allocation7 + $0x70] sm:$0xff]
          %v1013 = vld [vmem:[#allocation7 + $0x78] sm:$0xff]
          %v1014 = vld [vmem:[#allocation9] sm:$0xff]
          %v1015 = vld [vmem:[#allocation9 + $0x8] sm:$0xff]
          %v1016 = vld [vmem:[#allocation9 + $0x10] sm:$0xff]
          %v1017 = vld [vmem:[#allocation9 + $0x18] sm:$0xff]
          %v1018 = vld [vmem:[#allocation9 + $0x20] sm:$0xff]
          %v1019 = vld [vmem:[#allocation9 + $0x28] sm:$0xff]
          %v1020 = vld [vmem:[#allocation9 + $0x30] sm:$0xff]
          %v1021 = vld [vmem:[#allocation9 + $0x38] sm:$0xff]
          %v1022 = vld [vmem:[#allocation9 + $0x40] sm:$0xff]
          %v1023 = vld [vmem:[#allocation9 + $0x48] sm:$0xff]
          %v1024 = vld [vmem:[#allocation9 + $0x50] sm:$0xff]
          %v1025 = vld [vmem:[#allocation9 + $0x58] sm:$0xff]
          %v1026 = vld [vmem:[#allocation9 + $0x60] sm:$0xff]
          %v1027 = vld [vmem:[#allocation9 + $0x68] sm:$0xff]
          %v1028 = vld [vmem:[#allocation9 + $0x70] sm:$0xff]
          %v1029 = vld [vmem:[#allocation9 + $0x78] sm:$0xff]
          %1030 = vmatprep.subr.mxu0 0.0
          %1031 = vmatpush1.msra.mxu0 %v1014
          %1032 = vmatprep.subr.mxu0 0.0
          %1033 = vmatpush1.msra.mxu0 %v1015
          %1034 = vmatprep.subr.mxu0 0.0
          %1035 = vmatpush1.msra.mxu0 %v1016
          %1036 = vmatprep.subr.mxu0 0.0
          %1037 = vmatpush1.msra.mxu0 %v1017
          %1038 = vmatprep.subr.mxu0 0.0
          %1039 = vmatpush1.msra.mxu0 %v1018
          %1040 = vmatprep.subr.mxu0 0.0
          %1041 = vmatpush1.msra.mxu0 %v1019
          %1042 = vmatprep.subr.mxu0 0.0
          %1043 = vmatpush1.msra.mxu0 %v1020
          %1044 = vmatprep.subr.mxu0 0.0
          %1045 = vmatpush1.msra.mxu0 %v1021
          %1046 = vmatprep.subr.mxu0 0.0
          %1047 = vmatpush1.msra.mxu0 %v1022
          %1048 = vmatprep.subr.mxu0 0.0
          %1049 = vmatpush1.msra.mxu0 %v1023
          %1050 = vmatprep.subr.mxu0 0.0
          %1051 = vmatpush1.msra.mxu0 %v1024
          %1052 = vmatprep.subr.mxu0 0.0
          %1053 = vmatpush1.msra.mxu0 %v1025
          %1054 = vmatprep.subr.mxu0 0.0
          %1055 = vmatpush1.msra.mxu0 %v1026
          %1056 = vmatprep.subr.mxu0 0.0
          %1057 = vmatpush1.msra.mxu0 %v1027
          %1058 = vmatprep.subr.mxu0 0.0
          %1059 = vmatpush1.msra.mxu0 %v1028
          %1060 = vmatprep.subr.mxu0 0.0
          %1061 = vmatpush1.msra.mxu0 %v1029
          %1062 = vmatprep.subr.mxu0 0.0
          %1063 = vmatpush1.msra.mxu0 0.0
          %1064 = vmatprep.subr.mxu0 0.0
          %1065 = vmatpush1.msra.mxu0 0.0
          %1066 = vmatprep.subr.mxu0 0.0
          %1067 = vmatpush1.msra.mxu0 0.0
          %1068 = vmatprep.subr.mxu0 0.0
          %1069 = vmatpush1.msra.mxu0 0.0
          %1070 = vmatprep.subr.mxu0 0.0
          %1071 = vmatpush1.msra.mxu0 0.0
          %1072 = vmatprep.subr.mxu0 0.0
          %1073 = vmatpush1.msra.mxu0 0.0
          %1074 = vmatprep.subr.mxu0 0.0
          %1075 = vmatpush1.msra.mxu0 0.0
          %1076 = vmatprep.subr.mxu0 0.0
          %1077 = vmatpush1.msra.mxu0 0.0
          %1078 = vmatprep.subr.mxu0 0.0
          %1079 = vmatpush1.msra.mxu0 0.0
          %1080 = vmatprep.subr.mxu0 0.0
          %1081 = vmatpush1.msra.mxu0 0.0
          %1082 = vmatprep.subr.mxu0 0.0
          %1083 = vmatpush1.msra.mxu0 0.0
          %1084 = vmatprep.subr.mxu0 0.0
          %1085 = vmatpush1.msra.mxu0 0.0
          %1086 = vmatprep.subr.mxu0 0.0
          %1087 = vmatpush1.msra.mxu0 0.0
          %1088 = vmatprep.subr.mxu0 0.0
          %1089 = vmatpush1.msra.mxu0 0.0
          %1090 = vmatprep.subr.mxu0 0.0
          %1091 = vmatpush1.msra.mxu0 0.0
          %1092 = vmatprep.subr.mxu0 0.0
          %1093 = vmatpush1.msra.mxu0 0.0
          %1094 = vmatprep.mubr.f32.mxu0 0.0
          %1095 = vmatmul.mubr.f32.gmra.mrb[0].mxu0 %v982
          %v1096 = vpop.f32.mrb[0].mxu0
          %v1097 = vadd.f32 0.0, %v1096
          %v1098 = vpop.f32.mrb[0].mxu0
          %1099 = vmatprep.mubr.f32.mxu0 0.0
          %1100 = vmatmul.mubr.f32.gmra.mrb[0].mxu0 %v983
          %v1101 = vpop.f32.mrb[0].mxu0
          %v1102 = vadd.f32 0.0, %v1101
          %v1103 = vpop.f32.mrb[0].mxu0
          %1104 = vmatprep.mubr.f32.mxu0 0.0
          %1105 = vmatmul.mubr.f32.gmra.mrb[0].mxu0 %v984
          %v1106 = vpop.f32.mrb[0].mxu0
          %v1107 = vadd.f32 0.0, %v1106
          %v1108 = vpop.f32.mrb[0].mxu0
          %1109 = vmatprep.mubr.f32.mxu0 0.0
          %1110 = vmatmul.mubr.f32.gmra.mrb[0].mxu0 %v985
          %v1111 = vpop.f32.mrb[0].mxu0
          %v1112 = vadd.f32 0.0, %v1111
          %v1113 = vpop.f32.mrb[0].mxu0
          %1114 = vmatprep.mubr.f32.mxu0 0.0
          %1115 = vmatmul.mubr.f32.gmra.mrb[0].mxu0 %v986
          %v1116 = vpop.f32.mrb[0].mxu0
          %v1117 = vadd.f32 0.0, %v1116
          %v1118 = vpop.f32.mrb[0].mxu0
          %1119 = vmatprep.mubr.f32.mxu0 0.0
          %1120 = vmatmul.mubr.f32.gmra.mrb[0].mxu0 %v987
          %v1121 = vpop.f32.mrb[0].mxu0
          %v1122 = vadd.f32 0.0, %v1121
          %v1123 = vpop.f32.mrb[0].mxu0
          %1124 = vmatprep.mubr.f32.mxu0 0.0
          %1125 = vmatmul.mubr.f32.gmra.mrb[0].mxu0 %v988
          %v1126 = vpop.f32.mrb[0].mxu0
          %v1127 = vadd.f32 0.0, %v1126
          %v1128 = vpop.f32.mrb[0].mxu0
          %1129 = vmatprep.mubr.f32.mxu0 0.0
          %1130 = vmatmul.mubr.f32.gmra.mrb[0].mxu0 %v989
          %v1131 = vpop.f32.mrb[0].mxu0
          %v1132 = vadd.f32 0.0, %v1131
          %v1133 = vpop.f32.mrb[0].mxu0
          %1134 = vmatprep.mubr.f32.mxu0 0.0
          %1135 = vmatmul.mubr.f32.gmra.mrb[0].mxu0 %v990
          %v1136 = vpop.f32.mrb[0].mxu0
          %v1137 = vadd.f32 0.0, %v1136
          %v1138 = vpop.f32.mrb[0].mxu0
          %1139 = vmatprep.mubr.f32.mxu0 0.0
          %1140 = vmatmul.mubr.f32.gmra.mrb[0].mxu0 %v991
          %v1141 = vpop.f32.mrb[0].mxu0
          %v1142 = vadd.f32 0.0, %v1141
          %v1143 = vpop.f32.mrb[0].mxu0
          %1144 = vmatprep.mubr.f32.mxu0 0.0
          %1145 = vmatmul.mubr.f32.gmra.mrb[0].mxu0 %v992
          %v1146 = vpop.f32.mrb[0].mxu0
          %v1147 = vadd.f32 0.0, %v1146
          %v1148 = vpop.f32.mrb[0].mxu0
          %1149 = vmatprep.mubr.f32.mxu0 0.0
          %1150 = vmatmul.mubr.f32.gmra.mrb[0].mxu0 %v993
          %v1151 = vpop.f32.mrb[0].mxu0
          %v1152 = vadd.f32 0.0, %v1151
          %v1153 = vpop.f32.mrb[0].mxu0
          %1154 = vmatprep.mubr.f32.mxu0 0.0
          %1155 = vmatmul.mubr.f32.gmra.mrb[0].mxu0 %v994
          %v1156 = vpop.f32.mrb[0].mxu0
          %v1157 = vadd.f32 0.0, %v1156
          %v1158 = vpop.f32.mrb[0].mxu0
          %1159 = vmatprep.mubr.f32.mxu0 0.0
          %1160 = vmatmul.mubr.f32.gmra.mrb[0].mxu0 %v995
          %v1161 = vpop.f32.mrb[0].mxu0
          %v1162 = vadd.f32 0.0, %v1161
          %v1163 = vpop.f32.mrb[0].mxu0
          %1164 = vmatprep.mubr.f32.mxu0 0.0
          %1165 = vmatmul.mubr.f32.gmra.mrb[0].mxu0 %v996
          %v1166 = vpop.f32.mrb[0].mxu0
          %v1167 = vadd.f32 0.0, %v1166
          %v1168 = vpop.f32.mrb[0].mxu0
          %1169 = vmatprep.mubr.f32.mxu0 0.0
          %1170 = vmatmul.mubr.f32.gmra.mrb[0].mxu0 %v997
          %v1171 = vpop.f32.mrb[0].mxu0
          %v1172 = vadd.f32 0.0, %v1171
          %v1173 = vpop.f32.mrb[0].mxu0
          %1174 = vdwg.mxu0
          %1175 = vmatprep.subr.mxu0 0.0
          %1176 = vmatpush1.msra.mxu0 %v998
          %1177 = vmatprep.subr.mxu0 0.0
          %1178 = vmatpush1.msra.mxu0 %v999
          %1179 = vmatprep.subr.mxu0 0.0
          %1180 = vmatpush1.msra.mxu0 %v1000
          %1181 = vmatprep.subr.mxu0 0.0
          %1182 = vmatpush1.msra.mxu0 %v1001
          %1183 = vmatprep.subr.mxu0 0.0
          %1184 = vmatpush1.msra.mxu0 %v1002
          %1185 = vmatprep.subr.mxu0 0.0
          %1186 = vmatpush1.msra.mxu0 %v1003
          %1187 = vmatprep.subr.mxu0 0.0
          %1188 = vmatpush1.msra.mxu0 %v1004
          %1189 = vmatprep.subr.mxu0 0.0
          %1190 = vmatpush1.msra.mxu0 %v1005
          %1191 = vmatprep.subr.mxu0 0.0
          %1192 = vmatpush1.msra.mxu0 %v1006
          %1193 = vmatprep.subr.mxu0 0.0
          %1194 = vmatpush1.msra.mxu0 %v1007
          %1195 = vmatprep.subr.mxu0 0.0
          %1196 = vmatpush1.msra.mxu0 %v1008
          %1197 = vmatprep.subr.mxu0 0.0
          %1198 = vmatpush1.msra.mxu0 %v1009
          %1199 = vmatprep.subr.mxu0 0.0
          %1200 = vmatpush1.msra.mxu0 %v1010
          %1201 = vmatprep.subr.mxu0 0.0
          %1202 = vmatpush1.msra.mxu0 %v1011
          %1203 = vmatprep.subr.mxu0 0.0
          %1204 = vmatpush1.msra.mxu0 %v1012
          %1205 = vmatprep.subr.mxu0 0.0
          %1206 = vmatpush1.msra.mxu0 %v1013
          %1207 = vmatprep.subr.mxu0 0.0
          %1208 = vmatpush1.msra.mxu0 0.0
          %1209 = vmatprep.subr.mxu0 0.0
          %1210 = vmatpush1.msra.mxu0 0.0
          %1211 = vmatprep.subr.mxu0 0.0
          %1212 = vmatpush1.msra.mxu0 0.0
          %1213 = vmatprep.subr.mxu0 0.0
          %1214 = vmatpush1.msra.mxu0 0.0
          %1215 = vmatprep.subr.mxu0 0.0
          %1216 = vmatpush1.msra.mxu0 0.0
          %1217 = vmatprep.subr.mxu0 0.0
          %1218 = vmatpush1.msra.mxu0 0.0
          %1219 = vmatprep.subr.mxu0 0.0
          %1220 = vmatpush1.msra.mxu0 0.0
          %1221 = vmatprep.subr.mxu0 0.0
          %1222 = vmatpush1.msra.mxu0 0.0
          %1223 = vmatprep.subr.mxu0 0.0
          %1224 = vmatpush1.msra.mxu0 0.0
          %1225 = vmatprep.subr.mxu0 0.0
          %1226 = vmatpush1.msra.mxu0 0.0
          %1227 = vmatprep.subr.mxu0 0.0
          %1228 = vmatpush1.msra.mxu0 0.0
          %1229 = vmatprep.subr.mxu0 0.0
          %1230 = vmatpush1.msra.mxu0 0.0
          %1231 = vmatprep.subr.mxu0 0.0
          %1232 = vmatpush1.msra.mxu0 0.0
          %1233 = vmatprep.subr.mxu0 0.0
          %1234 = vmatpush1.msra.mxu0 0.0
          %1235 = vmatprep.subr.mxu0 0.0
          %1236 = vmatpush1.msra.mxu0 0.0
          %1237 = vmatprep.subr.mxu0 0.0
          %1238 = vmatpush1.msra.mxu0 0.0
          %1239 = vmatprep.mubr.f32.mxu0 0.0
          %1240 = vmatmul.mubr.f32.gmra.mrb[0].mxu0 %v964
          %v1241 = vpop.f32.mrb[0].mxu0
          %v1242 = vadd.f32 %v1097, %v1241
          %v1243 = vpop.f32.mrb[0].mxu0
          %1244 = vmatprep.mubr.f32.mxu0 0.0
          %1245 = vmatmul.mubr.f32.gmra.mrb[0].mxu0 %v965
          %v1246 = vpop.f32.mrb[0].mxu0
          %v1247 = vadd.f32 %v1102, %v1246
          %v1248 = vpop.f32.mrb[0].mxu0
          %1249 = vmatprep.mubr.f32.mxu0 0.0
          %1250 = vmatmul.mubr.f32.gmra.mrb[0].mxu0 %v966
          %v1251 = vpop.f32.mrb[0].mxu0
          %v1252 = vadd.f32 %v1107, %v1251
          %v1253 = vpop.f32.mrb[0].mxu0
          %1254 = vmatprep.mubr.f32.mxu0 0.0
          %1255 = vmatmul.mubr.f32.gmra.mrb[0].mxu0 %v967
          %v1256 = vpop.f32.mrb[0].mxu0
          %v1257 = vadd.f32 %v1112, %v1256
          %v1258 = vpop.f32.mrb[0].mxu0
          %1259 = vmatprep.mubr.f32.mxu0 0.0
          %1260 = vmatmul.mubr.f32.gmra.mrb[0].mxu0 %v968
          %v1261 = vpop.f32.mrb[0].mxu0
          %v1262 = vadd.f32 %v1117, %v1261
          %v1263 = vpop.f32.mrb[0].mxu0
          %1264 = vmatprep.mubr.f32.mxu0 0.0
          %1265 = vmatmul.mubr.f32.gmra.mrb[0].mxu0 %v969
          %v1266 = vpop.f32.mrb[0].mxu0
          %v1267 = vadd.f32 %v1122, %v1266
          %v1268 = vpop.f32.mrb[0].mxu0
          %1269 = vmatprep.mubr.f32.mxu0 0.0
          %1270 = vmatmul.mubr.f32.gmra.mrb[0].mxu0 %v970
          %v1271 = vpop.f32.mrb[0].mxu0
          %v1272 = vadd.f32 %v1127, %v1271
          %v1273 = vpop.f32.mrb[0].mxu0
          %1274 = vmatprep.mubr.f32.mxu0 0.0
          %1275 = vmatmul.mubr.f32.gmra.mrb[0].mxu0 %v971
          %v1276 = vpop.f32.mrb[0].mxu0
          %v1277 = vadd.f32 %v1132, %v1276
          %v1278 = vpop.f32.mrb[0].mxu0
          %1279 = vmatprep.mubr.f32.mxu0 0.0
          %1280 = vmatmul.mubr.f32.gmra.mrb[0].mxu0 %v972
          %v1281 = vpop.f32.mrb[0].mxu0
          %v1282 = vadd.f32 %v1137, %v1281
          %v1283 = vpop.f32.mrb[0].mxu0
          %1284 = vmatprep.mubr.f32.mxu0 0.0
          %1285 = vmatmul.mubr.f32.gmra.mrb[0].mxu0 %v973
          %v1286 = vpop.f32.mrb[0].mxu0
          %v1287 = vadd.f32 %v1142, %v1286
          %v1288 = vpop.f32.mrb[0].mxu0
          %1289 = vmatprep.mubr.f32.mxu0 0.0
          %1290 = vmatmul.mubr.f32.gmra.mrb[0].mxu0 %v974
          %v1291 = vpop.f32.mrb[0].mxu0
          %v1292 = vadd.f32 %v1147, %v1291
          %v1293 = vpop.f32.mrb[0].mxu0
          %1294 = vmatprep.mubr.f32.mxu0 0.0
          %1295 = vmatmul.mubr.f32.gmra.mrb[0].mxu0 %v975
          %v1296 = vpop.f32.mrb[0].mxu0
          %v1297 = vadd.f32 %v1152, %v1296
          %v1298 = vpop.f32.mrb[0].mxu0
          %1299 = vmatprep.mubr.f32.mxu0 0.0
          %1300 = vmatmul.mubr.f32.gmra.mrb[0].mxu0 %v976
          %v1301 = vpop.f32.mrb[0].mxu0
          %v1302 = vadd.f32 %v1157, %v1301
          %v1303 = vpop.f32.mrb[0].mxu0
          %1304 = vmatprep.mubr.f32.mxu0 0.0
          %1305 = vmatmul.mubr.f32.gmra.mrb[0].mxu0 %v977
          %v1306 = vpop.f32.mrb[0].mxu0
          %v1307 = vadd.f32 %v1162, %v1306
          %v1308 = vpop.f32.mrb[0].mxu0
          %1309 = vmatprep.mubr.f32.mxu0 0.0
          %1310 = vmatmul.mubr.f32.gmra.mrb[0].mxu0 %v978
          %v1311 = vpop.f32.mrb[0].mxu0
          %v1312 = vadd.f32 %v1167, %v1311
          %v1313 = vpop.f32.mrb[0].mxu0
          %1314 = vmatprep.mubr.f32.mxu0 0.0
          %1315 = vmatmul.mubr.f32.gmra.mrb[0].mxu0 %v979
          %v1316 = vpop.f32.mrb[0].mxu0
          %v1317 = vadd.f32 %v1172, %v1316
          %v1318 = vpop.f32.mrb[0].mxu0
          %1319 = vdwg.mxu0
          %v1320 = vld [vmem:[%s5] sm:$0x1]
          %v1322 = vlaneseq
          %v1323 = vshrl.u32 %v1322, 7
          %v1324 = vsub.s32 0, %v1323
          %v1325 = vrot.slane %v1320, %v1324
          %v1327 = vadd.f32 %v1242, %v1325
          %v1328 = vadd.f32 %v1247, %v1325
          %v1329 = vadd.f32 %v1252, %v1325
          %v1330 = vadd.f32 %v1257, %v1325
          %v1331 = vadd.f32 %v1262, %v1325
          %v1332 = vadd.f32 %v1267, %v1325
          %v1333 = vadd.f32 %v1272, %v1325
          %v1334 = vadd.f32 %v1277, %v1325
          %v1335 = vadd.f32 %v1282, %v1325
          %v1336 = vadd.f32 %v1287, %v1325
          %v1337 = vadd.f32 %v1292, %v1325
          %v1338 = vadd.f32 %v1297, %v1325
          %v1339 = vadd.f32 %v1302, %v1325
          %v1340 = vadd.f32 %v1307, %v1325
          %v1341 = vadd.f32 %v1312, %v1325
          %v1342 = vadd.f32 %v1317, %v1325
          %v1343 = vmul.f32 %v1327, %v1327
          %v1344 = vmul.f32 %v1328, %v1328
          %v1345 = vmul.f32 %v1329, %v1329
          %v1346 = vmul.f32 %v1330, %v1330
          %v1347 = vmul.f32 %v1331, %v1331
          %v1348 = vmul.f32 %v1332, %v1332
          %v1349 = vmul.f32 %v1333, %v1333
          %v1350 = vmul.f32 %v1334, %v1334
          %v1351 = vmul.f32 %v1335, %v1335
          %v1352 = vmul.f32 %v1336, %v1336
          %v1353 = vmul.f32 %v1337, %v1337
          %v1354 = vmul.f32 %v1338, %v1338
          %v1355 = vmul.f32 %v1339, %v1339
          %v1356 = vmul.f32 %v1340, %v1340
          %v1357 = vmul.f32 %v1341, %v1341
          %v1358 = vmul.f32 %v1342, %v1342
          %1359 = vadd.xlane.f32.xlu0 %v1343
          %v1360 = vpop.xlane.xlu0 %1359
          %1361 = vadd.xlane.f32.xlu0 %v1344
          %v1362 = vpop.xlane.xlu0 %1361
          %1363 = vadd.xlane.f32.xlu0 %v1345
          %v1364 = vpop.xlane.xlu0 %1363
          %1365 = vadd.xlane.f32.xlu0 %v1346
          %v1366 = vpop.xlane.xlu0 %1365
          %1367 = vadd.xlane.f32.xlu0 %v1347
          %v1368 = vpop.xlane.xlu0 %1367
          %1369 = vadd.xlane.f32.xlu0 %v1348
          %v1370 = vpop.xlane.xlu0 %1369
          %1371 = vadd.xlane.f32.xlu0 %v1349
          %v1372 = vpop.xlane.xlu0 %1371
          %1373 = vadd.xlane.f32.xlu0 %v1350
          %v1374 = vpop.xlane.xlu0 %1373
          %1375 = vadd.xlane.f32.xlu0 %v1351
          %v1376 = vpop.xlane.xlu0 %1375
          %1377 = vadd.xlane.f32.xlu0 %v1352
          %v1378 = vpop.xlane.xlu0 %1377
          %1379 = vadd.xlane.f32.xlu0 %v1353
          %v1380 = vpop.xlane.xlu0 %1379
          %1381 = vadd.xlane.f32.xlu0 %v1354
          %v1382 = vpop.xlane.xlu0 %1381
          %1383 = vadd.xlane.f32.xlu0 %v1355
          %v1384 = vpop.xlane.xlu0 %1383
          %1385 = vadd.xlane.f32.xlu0 %v1356
          %v1386 = vpop.xlane.xlu0 %1385
          %1387 = vadd.xlane.f32.xlu0 %v1357
          %v1388 = vpop.xlane.xlu0 %1387
          %1389 = vadd.xlane.f32.xlu0 %v1358
          %v1390 = vpop.xlane.xlu0 %1389
          %v1391 = vmax.f32 %v1360, 1e-24
          %v1392 = vmax.f32 %v1362, 1e-24
          %v1393 = vmax.f32 %v1364, 1e-24
          %v1394 = vmax.f32 %v1366, 1e-24
          %v1395 = vmax.f32 %v1368, 1e-24
          %v1396 = vmax.f32 %v1370, 1e-24
          %v1397 = vmax.f32 %v1372, 1e-24
          %v1398 = vmax.f32 %v1374, 1e-24
          %v1399 = vmax.f32 %v1376, 1e-24
          %v1400 = vmax.f32 %v1378, 1e-24
          %v1401 = vmax.f32 %v1380, 1e-24
          %v1402 = vmax.f32 %v1382, 1e-24
          %v1403 = vmax.f32 %v1384, 1e-24
          %v1404 = vmax.f32 %v1386, 1e-24
          %v1405 = vmax.f32 %v1388, 1e-24
          %v1406 = vmax.f32 %v1390, 1e-24
          %v1407 = vrsqrt.pop %v1391
          %v1408 = vrsqrt.pop %v1392
          %v1409 = vrsqrt.pop %v1393
          %v1410 = vrsqrt.pop %v1394
          %v1411 = vrsqrt.pop %v1395
          %v1412 = vrsqrt.pop %v1396
          %v1413 = vrsqrt.pop %v1397
          %v1414 = vrsqrt.pop %v1398
          %v1415 = vrsqrt.pop %v1399
          %v1416 = vrsqrt.pop %v1400
          %v1417 = vrsqrt.pop %v1401
          %v1418 = vrsqrt.pop %v1402
          %v1419 = vrsqrt.pop %v1403
          %v1420 = vrsqrt.pop %v1404
          %v1421 = vrsqrt.pop %v1405
          %v1422 = vrsqrt.pop %v1406
          %v1423 = vmul.f32 %v1327, %v1407
          %v1424 = vmul.f32 %v1328, %v1408
          %v1425 = vmul.f32 %v1329, %v1409
          %v1426 = vmul.f32 %v1330, %v1410
          %v1427 = vmul.f32 %v1331, %v1411
          %v1428 = vmul.f32 %v1332, %v1412
          %v1429 = vmul.f32 %v1333, %v1413
          %v1430 = vmul.f32 %v1334, %v1414
          %v1431 = vmul.f32 %v1335, %v1415
          %v1432 = vmul.f32 %v1336, %v1416
          %v1433 = vmul.f32 %v1337, %v1417
          %v1434 = vmul.f32 %v1338, %v1418
          %v1435 = vmul.f32 %v1339, %v1419
          %v1436 = vmul.f32 %v1340, %v1420
          %v1437 = vmul.f32 %v1341, %v1421
          %v1438 = vmul.f32 %v1342, %v1422
          %v1439 = vmax.f32 %v1423, 0.0
          %v1440 = vmax.f32 %v1424, 0.0
          %v1441 = vmax.f32 %v1425, 0.0
          %v1442 = vmax.f32 %v1426, 0.0
          %v1443 = vmax.f32 %v1427, 0.0
          %v1444 = vmax.f32 %v1428, 0.0
          %v1445 = vmax.f32 %v1429, 0.0
          %v1446 = vmax.f32 %v1430, 0.0
          %v1447 = vmax.f32 %v1431, 0.0
          %v1448 = vmax.f32 %v1432, 0.0
          %v1449 = vmax.f32 %v1433, 0.0
          %v1450 = vmax.f32 %v1434, 0.0
          %v1451 = vmax.f32 %v1435, 0.0
          %v1452 = vmax.f32 %v1436, 0.0
          %v1453 = vmax.f32 %v1437, 0.0
          %v1454 = vmax.f32 %v1438, 0.0
          %v1455 = vld [vmem:[#allocation10] sm:$0xff]
          %v1456 = vld [vmem:[#allocation10 + $0x8] sm:$0xff]
          %v1457 = vld [vmem:[#allocation10 + $0x10] sm:$0xff]
          %v1458 = vld [vmem:[#allocation10 + $0x18] sm:$0xff]
          %v1459 = vld [vmem:[#allocation10 + $0x20] sm:$0xff]
          %v1460 = vld [vmem:[#allocation10 + $0x28] sm:$0xff]
          %v1461 = vld [vmem:[#allocation10 + $0x30] sm:$0xff]
          %v1462 = vld [vmem:[#allocation10 + $0x38] sm:$0xff]
          %v1463 = vld [vmem:[#allocation10 + $0x40] sm:$0xff]
          %v1464 = vld [vmem:[#allocation10 + $0x48] sm:$0xff]
          %v1465 = vld [vmem:[#allocation10 + $0x50] sm:$0xff]
          %v1466 = vld [vmem:[#allocation10 + $0x58] sm:$0xff]
          %v1467 = vld [vmem:[#allocation10 + $0x60] sm:$0xff]
          %v1468 = vld [vmem:[#allocation10 + $0x68] sm:$0xff]
          %v1469 = vld [vmem:[#allocation10 + $0x70] sm:$0xff]
          %v1470 = vld [vmem:[#allocation10 + $0x78] sm:$0xff]
          %1471 = vmatprep.subr.mxu0 0.0
          %1472 = vmatpush1.msra.mxu0 %v1455
          %1473 = vmatprep.subr.mxu0 0.0
          %1474 = vmatpush1.msra.mxu0 %v1456
          %1475 = vmatprep.subr.mxu0 0.0
          %1476 = vmatpush1.msra.mxu0 %v1457
          %1477 = vmatprep.subr.mxu0 0.0
          %1478 = vmatpush1.msra.mxu0 %v1458
          %1479 = vmatprep.subr.mxu0 0.0
          %1480 = vmatpush1.msra.mxu0 %v1459
          %1481 = vmatprep.subr.mxu0 0.0
          %1482 = vmatpush1.msra.mxu0 %v1460
          %1483 = vmatprep.subr.mxu0 0.0
          %1484 = vmatpush1.msra.mxu0 %v1461
          %1485 = vmatprep.subr.mxu0 0.0
          %1486 = vmatpush1.msra.mxu0 %v1462
          %1487 = vmatprep.subr.mxu0 0.0
          %1488 = vmatpush1.msra.mxu0 %v1463
          %1489 = vmatprep.subr.mxu0 0.0
          %1490 = vmatpush1.msra.mxu0 %v1464
          %1491 = vmatprep.subr.mxu0 0.0
          %1492 = vmatpush1.msra.mxu0 %v1465
          %1493 = vmatprep.subr.mxu0 0.0
          %1494 = vmatpush1.msra.mxu0 %v1466
          %1495 = vmatprep.subr.mxu0 0.0
          %1496 = vmatpush1.msra.mxu0 %v1467
          %1497 = vmatprep.subr.mxu0 0.0
          %1498 = vmatpush1.msra.mxu0 %v1468
          %1499 = vmatprep.subr.mxu0 0.0
          %1500 = vmatpush1.msra.mxu0 %v1469
          %1501 = vmatprep.subr.mxu0 0.0
          %1502 = vmatpush1.msra.mxu0 %v1470
          %1503 = vmatprep.subr.mxu0 0.0
          %1504 = vmatpush1.msra.mxu0 0.0
          %1505 = vmatprep.subr.mxu0 0.0
          %1506 = vmatpush1.msra.mxu0 0.0
          %1507 = vmatprep.subr.mxu0 0.0
          %1508 = vmatpush1.msra.mxu0 0.0
          %1509 = vmatprep.subr.mxu0 0.0
          %1510 = vmatpush1.msra.mxu0 0.0
          %1511 = vmatprep.subr.mxu0 0.0
          %1512 = vmatpush1.msra.mxu0 0.0
          %1513 = vmatprep.subr.mxu0 0.0
          %1514 = vmatpush1.msra.mxu0 0.0
          %1515 = vmatprep.subr.mxu0 0.0
          %1516 = vmatpush1.msra.mxu0 0.0
          %1517 = vmatprep.subr.mxu0 0.0
          %1518 = vmatpush1.msra.mxu0 0.0
          %1519 = vmatprep.subr.mxu0 0.0
          %1520 = vmatpush1.msra.mxu0 0.0
          %1521 = vmatprep.subr.mxu0 0.0
          %1522 = vmatpush1.msra.mxu0 0.0
          %1523 = vmatprep.subr.mxu0 0.0
          %1524 = vmatpush1.msra.mxu0 0.0
          %1525 = vmatprep.subr.mxu0 0.0
          %1526 = vmatpush1.msra.mxu0 0.0
          %1527 = vmatprep.subr.mxu0 0.0
          %1528 = vmatpush1.msra.mxu0 0.0
          %1529 = vmatprep.subr.mxu0 0.0
          %1530 = vmatpush1.msra.mxu0 0.0
          %1531 = vmatprep.subr.mxu0 0.0
          %1532 = vmatpush1.msra.mxu0 0.0
          %1533 = vmatprep.subr.mxu0 0.0
          %1534 = vmatpush1.msra.mxu0 0.0
          %1535 = vmatprep.mubr.f32.mxu0 0.0
          %1536 = vmatmul.mubr.f32.gmra.mrb[0].mxu0 %v1439
          %v1537 = vpop.f32.mrb[0].mxu0
          %v1538 = vadd.f32 0.0, %v1537
          %v1539 = vpop.f32.mrb[0].mxu0
          %1540 = vmatprep.mubr.f32.mxu0 0.0
          %1541 = vmatmul.mubr.f32.gmra.mrb[0].mxu0 %v1440
          %v1542 = vpop.f32.mrb[0].mxu0
          %v1543 = vadd.f32 0.0, %v1542
          %v1544 = vpop.f32.mrb[0].mxu0
          %1545 = vmatprep.mubr.f32.mxu0 0.0
          %1546 = vmatmul.mubr.f32.gmra.mrb[0].mxu0 %v1441
          %v1547 = vpop.f32.mrb[0].mxu0
          %v1548 = vadd.f32 0.0, %v1547
          %v1549 = vpop.f32.mrb[0].mxu0
          %1550 = vmatprep.mubr.f32.mxu0 0.0
          %1551 = vmatmul.mubr.f32.gmra.mrb[0].mxu0 %v1442
          %v1552 = vpop.f32.mrb[0].mxu0
          %v1553 = vadd.f32 0.0, %v1552
          %v1554 = vpop.f32.mrb[0].mxu0
          %1555 = vmatprep.mubr.f32.mxu0 0.0
          %1556 = vmatmul.mubr.f32.gmra.mrb[0].mxu0 %v1443
          %v1557 = vpop.f32.mrb[0].mxu0
          %v1558 = vadd.f32 0.0, %v1557
          %v1559 = vpop.f32.mrb[0].mxu0
          %1560 = vmatprep.mubr.f32.mxu0 0.0
          %1561 = vmatmul.mubr.f32.gmra.mrb[0].mxu0 %v1444
          %v1562 = vpop.f32.mrb[0].mxu0
          %v1563 = vadd.f32 0.0, %v1562
          %v1564 = vpop.f32.mrb[0].mxu0
          %1565 = vmatprep.mubr.f32.mxu0 0.0
          %1566 = vmatmul.mubr.f32.gmra.mrb[0].mxu0 %v1445
          %v1567 = vpop.f32.mrb[0].mxu0
          %v1568 = vadd.f32 0.0, %v1567
          %v1569 = vpop.f32.mrb[0].mxu0
          %1570 = vmatprep.mubr.f32.mxu0 0.0
          %1571 = vmatmul.mubr.f32.gmra.mrb[0].mxu0 %v1446
          %v1572 = vpop.f32.mrb[0].mxu0
          %v1573 = vadd.f32 0.0, %v1572
          %v1574 = vpop.f32.mrb[0].mxu0
          %1575 = vmatprep.mubr.f32.mxu0 0.0
          %1576 = vmatmul.mubr.f32.gmra.mrb[0].mxu0 %v1447
          %v1577 = vpop.f32.mrb[0].mxu0
          %v1578 = vadd.f32 0.0, %v1577
          %v1579 = vpop.f32.mrb[0].mxu0
          %1580 = vmatprep.mubr.f32.mxu0 0.0
          %1581 = vmatmul.mubr.f32.gmra.mrb[0].mxu0 %v1448
          %v1582 = vpop.f32.mrb[0].mxu0
          %v1583 = vadd.f32 0.0, %v1582
          %v1584 = vpop.f32.mrb[0].mxu0
          %1585 = vmatprep.mubr.f32.mxu0 0.0
          %1586 = vmatmul.mubr.f32.gmra.mrb[0].mxu0 %v1449
          %v1587 = vpop.f32.mrb[0].mxu0
          %v1588 = vadd.f32 0.0, %v1587
          %v1589 = vpop.f32.mrb[0].mxu0
          %1590 = vmatprep.mubr.f32.mxu0 0.0
          %1591 = vmatmul.mubr.f32.gmra.mrb[0].mxu0 %v1450
          %v1592 = vpop.f32.mrb[0].mxu0
          %v1593 = vadd.f32 0.0, %v1592
          %v1594 = vpop.f32.mrb[0].mxu0
          %1595 = vmatprep.mubr.f32.mxu0 0.0
          %1596 = vmatmul.mubr.f32.gmra.mrb[0].mxu0 %v1451
          %v1597 = vpop.f32.mrb[0].mxu0
          %v1598 = vadd.f32 0.0, %v1597
          %v1599 = vpop.f32.mrb[0].mxu0
          %1600 = vmatprep.mubr.f32.mxu0 0.0
          %1601 = vmatmul.mubr.f32.gmra.mrb[0].mxu0 %v1452
          %v1602 = vpop.f32.mrb[0].mxu0
          %v1603 = vadd.f32 0.0, %v1602
          %v1604 = vpop.f32.mrb[0].mxu0
          %1605 = vmatprep.mubr.f32.mxu0 0.0
          %1606 = vmatmul.mubr.f32.gmra.mrb[0].mxu0 %v1453
          %v1607 = vpop.f32.mrb[0].mxu0
          %v1608 = vadd.f32 0.0, %v1607
          %v1609 = vpop.f32.mrb[0].mxu0
          %1610 = vmatprep.mubr.f32.mxu0 0.0
          %1611 = vmatmul.mubr.f32.gmra.mrb[0].mxu0 %v1454
          %v1612 = vpop.f32.mrb[0].mxu0
          %v1613 = vadd.f32 0.0, %v1612
          %v1614 = vpop.f32.mrb[0].mxu0
          %1615 = vdwg.mxu0
          %1616 = vst [vmem:[%s568] sm:$0xff] %v1538
          %1617 = vst [vmem:[%s568 + $0x8] sm:$0xff] %v1543
          %1618 = vst [vmem:[%s568 + $0x10] sm:$0xff] %v1548
          %1619 = vst [vmem:[%s568 + $0x18] sm:$0xff] %v1553
          %1620 = vst [vmem:[%s568 + $0x20] sm:$0xff] %v1558
          %1621 = vst [vmem:[%s568 + $0x28] sm:$0xff] %v1563
          %1622 = vst [vmem:[%s568 + $0x30] sm:$0xff] %v1568
          %1623 = vst [vmem:[%s568 + $0x38] sm:$0xff] %v1573
          %1624 = vst [vmem:[%s568 + $0x40] sm:$0xff] %v1578
          %1625 = vst [vmem:[%s568 + $0x48] sm:$0xff] %v1583
          %1626 = vst [vmem:[%s568 + $0x50] sm:$0xff] %v1588
          %1627 = vst [vmem:[%s568 + $0x58] sm:$0xff] %v1593
          %1628 = vst [vmem:[%s568 + $0x60] sm:$0xff] %v1598
          %1629 = vst [vmem:[%s568 + $0x68] sm:$0xff] %v1603
          %1630 = vst [vmem:[%s568 + $0x70] sm:$0xff] %v1608
          %1631 = vst [vmem:[%s568 + $0x78] sm:$0xff] %v1613
          %v1632 = vld [vmem:[#allocation12] sm:$0xff]
          %v1633 = vld [vmem:[#allocation12 + $0x8] sm:$0xff]
          %v1634 = vld [vmem:[#allocation12 + $0x10] sm:$0xff]
          %v1635 = vld [vmem:[#allocation12 + $0x18] sm:$0xff]
          %v1636 = vld [vmem:[#allocation12 + $0x20] sm:$0xff]
          %v1637 = vld [vmem:[#allocation12 + $0x28] sm:$0xff]
          %v1638 = vld [vmem:[#allocation12 + $0x30] sm:$0xff]
          %v1639 = vld [vmem:[#allocation12 + $0x38] sm:$0xff]
          %v1640 = vld [vmem:[#allocation12 + $0x40] sm:$0xff]
          %v1641 = vld [vmem:[#allocation12 + $0x48] sm:$0xff]
          %v1642 = vld [vmem:[#allocation12 + $0x50] sm:$0xff]
          %v1643 = vld [vmem:[#allocation12 + $0x58] sm:$0xff]
          %v1644 = vld [vmem:[#allocation12 + $0x60] sm:$0xff]
          %v1645 = vld [vmem:[#allocation12 + $0x68] sm:$0xff]
          %v1646 = vld [vmem:[#allocation12 + $0x70] sm:$0xff]
          %v1647 = vld [vmem:[#allocation12 + $0x78] sm:$0xff]
          %v1648 = vld [vmem:[%s8] sm:$0x1]
          %v1650 = vlaneseq
          %v1651 = vshrl.u32 %v1650, 7
          %v1652 = vsub.s32 0, %v1651
          %v1653 = vrot.slane %v1648, %v1652
          %1655 = vmatprep.subr.mxu0 0.0
          %1656 = vmatpush1.msra.mxu0 %v1632
          %1657 = vmatprep.subr.mxu0 0.0
          %1658 = vmatpush1.msra.mxu0 %v1633
          %1659 = vmatprep.subr.mxu0 0.0
          %1660 = vmatpush1.msra.mxu0 %v1634
          %1661 = vmatprep.subr.mxu0 0.0
          %1662 = vmatpush1.msra.mxu0 %v1635
          %1663 = vmatprep.subr.mxu0 0.0
          %1664 = vmatpush1.msra.mxu0 %v1636
          %1665 = vmatprep.subr.mxu0 0.0
          %1666 = vmatpush1.msra.mxu0 %v1637
          %1667 = vmatprep.subr.mxu0 0.0
          %1668 = vmatpush1.msra.mxu0 %v1638
          %1669 = vmatprep.subr.mxu0 0.0
          %1670 = vmatpush1.msra.mxu0 %v1639
          %1671 = vmatprep.subr.mxu0 0.0
          %1672 = vmatpush1.msra.mxu0 %v1640
          %1673 = vmatprep.subr.mxu0 0.0
          %1674 = vmatpush1.msra.mxu0 %v1641
          %1675 = vmatprep.subr.mxu0 0.0
          %1676 = vmatpush1.msra.mxu0 %v1642
          %1677 = vmatprep.subr.mxu0 0.0
          %1678 = vmatpush1.msra.mxu0 %v1643
          %1679 = vmatprep.subr.mxu0 0.0
          %1680 = vmatpush1.msra.mxu0 %v1644
          %1681 = vmatprep.subr.mxu0 0.0
          %1682 = vmatpush1.msra.mxu0 %v1645
          %1683 = vmatprep.subr.mxu0 0.0
          %1684 = vmatpush1.msra.mxu0 %v1646
          %1685 = vmatprep.subr.mxu0 0.0
          %1686 = vmatpush1.msra.mxu0 %v1647
          %1687 = vmatprep.subr.mxu0 0.0
          %1688 = vmatpush1.msra.mxu0 0.0
          %1689 = vmatprep.subr.mxu0 0.0
          %1690 = vmatpush1.msra.mxu0 0.0
          %1691 = vmatprep.subr.mxu0 0.0
          %1692 = vmatpush1.msra.mxu0 0.0
          %1693 = vmatprep.subr.mxu0 0.0
          %1694 = vmatpush1.msra.mxu0 0.0
          %1695 = vmatprep.subr.mxu0 0.0
          %1696 = vmatpush1.msra.mxu0 0.0
          %1697 = vmatprep.subr.mxu0 0.0
          %1698 = vmatpush1.msra.mxu0 0.0
          %1699 = vmatprep.subr.mxu0 0.0
          %1700 = vmatpush1.msra.mxu0 0.0
          %1701 = vmatprep.subr.mxu0 0.0
          %1702 = vmatpush1.msra.mxu0 0.0
          %1703 = vmatprep.subr.mxu0 0.0
          %1704 = vmatpush1.msra.mxu0 0.0
          %1705 = vmatprep.subr.mxu0 0.0
          %1706 = vmatpush1.msra.mxu0 0.0
          %1707 = vmatprep.subr.mxu0 0.0
          %1708 = vmatpush1.msra.mxu0 0.0
          %1709 = vmatprep.subr.mxu0 0.0
          %1710 = vmatpush1.msra.mxu0 0.0
          %1711 = vmatprep.subr.mxu0 0.0
          %1712 = vmatpush1.msra.mxu0 0.0
          %1713 = vmatprep.subr.mxu0 0.0
          %1714 = vmatpush1.msra.mxu0 0.0
          %1715 = vmatprep.subr.mxu0 0.0
          %1716 = vmatpush1.msra.mxu0 0.0
          %1717 = vmatprep.subr.mxu0 0.0
          %1718 = vmatpush1.msra.mxu0 0.0
          %1719 = vmatprep.mubr.f32.mxu0 0.0
          %1720 = vmatmul.mubr.f32.gmra.mrb[0].mxu0 %v1439
          %v1721 = vpop.f32.mrb[0].mxu0
          %v1722 = vadd.f32 %v1653, %v1721
          %v1723 = vpop.f32.mrb[0].mxu0
          %1724 = vmatprep.mubr.f32.mxu0 0.0
          %1725 = vmatmul.mubr.f32.gmra.mrb[0].mxu0 %v1440
          %v1726 = vpop.f32.mrb[0].mxu0
          %v1727 = vadd.f32 %v1653, %v1726
          %v1728 = vpop.f32.mrb[0].mxu0
          %1729 = vmatprep.mubr.f32.mxu0 0.0
          %1730 = vmatmul.mubr.f32.gmra.mrb[0].mxu0 %v1441
          %v1731 = vpop.f32.mrb[0].mxu0
          %v1732 = vadd.f32 %v1653, %v1731
          %v1733 = vpop.f32.mrb[0].mxu0
          %1734 = vmatprep.mubr.f32.mxu0 0.0
          %1735 = vmatmul.mubr.f32.gmra.mrb[0].mxu0 %v1442
          %v1736 = vpop.f32.mrb[0].mxu0
          %v1737 = vadd.f32 %v1653, %v1736
          %v1738 = vpop.f32.mrb[0].mxu0
          %1739 = vmatprep.mubr.f32.mxu0 0.0
          %1740 = vmatmul.mubr.f32.gmra.mrb[0].mxu0 %v1443
          %v1741 = vpop.f32.mrb[0].mxu0
          %v1742 = vadd.f32 %v1653, %v1741
          %v1743 = vpop.f32.mrb[0].mxu0
          %1744 = vmatprep.mubr.f32.mxu0 0.0
          %1745 = vmatmul.mubr.f32.gmra.mrb[0].mxu0 %v1444
          %v1746 = vpop.f32.mrb[0].mxu0
          %v1747 = vadd.f32 %v1653, %v1746
          %v1748 = vpop.f32.mrb[0].mxu0
          %1749 = vmatprep.mubr.f32.mxu0 0.0
          %1750 = vmatmul.mubr.f32.gmra.mrb[0].mxu0 %v1445
          %v1751 = vpop.f32.mrb[0].mxu0
          %v1752 = vadd.f32 %v1653, %v1751
          %v1753 = vpop.f32.mrb[0].mxu0
          %1754 = vmatprep.mubr.f32.mxu0 0.0
          %1755 = vmatmul.mubr.f32.gmra.mrb[0].mxu0 %v1446
          %v1756 = vpop.f32.mrb[0].mxu0
          %v1757 = vadd.f32 %v1653, %v1756
          %v1758 = vpop.f32.mrb[0].mxu0
          %1759 = vmatprep.mubr.f32.mxu0 0.0
          %1760 = vmatmul.mubr.f32.gmra.mrb[0].mxu0 %v1447
          %v1761 = vpop.f32.mrb[0].mxu0
          %v1762 = vadd.f32 %v1653, %v1761
          %v1763 = vpop.f32.mrb[0].mxu0
          %1764 = vmatprep.mubr.f32.mxu0 0.0
          %1765 = vmatmul.mubr.f32.gmra.mrb[0].mxu0 %v1448
          %v1766 = vpop.f32.mrb[0].mxu0
          %v1767 = vadd.f32 %v1653, %v1766
          %v1768 = vpop.f32.mrb[0].mxu0
          %1769 = vmatprep.mubr.f32.mxu0 0.0
          %1770 = vmatmul.mubr.f32.gmra.mrb[0].mxu0 %v1449
          %v1771 = vpop.f32.mrb[0].mxu0
          %v1772 = vadd.f32 %v1653, %v1771
          %v1773 = vpop.f32.mrb[0].mxu0
          %1774 = vmatprep.mubr.f32.mxu0 0.0
          %1775 = vmatmul.mubr.f32.gmra.mrb[0].mxu0 %v1450
          %v1776 = vpop.f32.mrb[0].mxu0
          %v1777 = vadd.f32 %v1653, %v1776
          %v1778 = vpop.f32.mrb[0].mxu0
          %1779 = vmatprep.mubr.f32.mxu0 0.0
          %1780 = vmatmul.mubr.f32.gmra.mrb[0].mxu0 %v1451
          %v1781 = vpop.f32.mrb[0].mxu0
          %v1782 = vadd.f32 %v1653, %v1781
          %v1783 = vpop.f32.mrb[0].mxu0
          %1784 = vmatprep.mubr.f32.mxu0 0.0
          %1785 = vmatmul.mubr.f32.gmra.mrb[0].mxu0 %v1452
          %v1786 = vpop.f32.mrb[0].mxu0
          %v1787 = vadd.f32 %v1653, %v1786
          %v1788 = vpop.f32.mrb[0].mxu0
          %1789 = vmatprep.mubr.f32.mxu0 0.0
          %1790 = vmatmul.mubr.f32.gmra.mrb[0].mxu0 %v1453
          %v1791 = vpop.f32.mrb[0].mxu0
          %v1792 = vadd.f32 %v1653, %v1791
          %v1793 = vpop.f32.mrb[0].mxu0
          %1794 = vmatprep.mubr.f32.mxu0 0.0
          %1795 = vmatmul.mubr.f32.gmra.mrb[0].mxu0 %v1454
          %v1796 = vpop.f32.mrb[0].mxu0
          %v1797 = vadd.f32 %v1653, %v1796
          %v1798 = vpop.f32.mrb[0].mxu0
          %1799 = vdwg.mxu0
          %1800 = vst [vmem:[%s575] sm:$0xff] %v1722
          %1801 = vst [vmem:[%s575 + $0x8] sm:$0xff] %v1727
          %1802 = vst [vmem:[%s575 + $0x10] sm:$0xff] %v1732
          %1803 = vst [vmem:[%s575 + $0x18] sm:$0xff] %v1737
          %1804 = vst [vmem:[%s575 + $0x20] sm:$0xff] %v1742
          %1805 = vst [vmem:[%s575 + $0x28] sm:$0xff] %v1747
          %1806 = vst [vmem:[%s575 + $0x30] sm:$0xff] %v1752
          %1807 = vst [vmem:[%s575 + $0x38] sm:$0xff] %v1757
          %1808 = vst [vmem:[%s575 + $0x40] sm:$0xff] %v1762
          %1809 = vst [vmem:[%s575 + $0x48] sm:$0xff] %v1767
          %1810 = vst [vmem:[%s575 + $0x50] sm:$0xff] %v1772
          %1811 = vst [vmem:[%s575 + $0x58] sm:$0xff] %v1777
          %1812 = vst [vmem:[%s575 + $0x60] sm:$0xff] %v1782
          %1813 = vst [vmem:[%s575 + $0x68] sm:$0xff] %v1787
          %1814 = vst [vmem:[%s575 + $0x70] sm:$0xff] %v1792
          %1815 = vst [vmem:[%s575 + $0x78] sm:$0xff] %v1797
        $region125: #{tpu_custom_call.1} parent=92 // pred_fallthru
          _
        %s1816 = sand.u32 %s252, 1
        %s1817 = scalar_lea.sflag [#allocation6], %s1816
        %s1818 = sand.u32 %s252, 1
        %s1819 = smul.addr %s1818, 128
        %s1820 = scalar_lea.vmem [#allocation13], %s1819
        %s1821 = sand.u32 %s278, 1
        %s1822 = scalar_lea.sflag [#allocation15], %s1821
        %s1823 = sand.u32 %s278, 1
        %s1824 = smul.addr %s1823, 128
        %s1825 = scalar_lea.vmem [#allocation14], %s1824
        // Predicated region
        $region126: #{tpu_custom_call.1} parent=92 // pred_check
          %p1826 = pneg %p262
        $region127: #{tpu_custom_call.1} parent=92 // pred_check_branch
          %1828 = sbr.rel (%p1826) target = $region129
        $region128: #{tpu_custom_call.1} parent=92 // pred_region
          %s1829 = smul.u32 16, %s35
          %s1831 = ssub.s32 2048, 2048
          %1832 = vsyncadd %s1817, %s1831
          %s1833 = smul.addr %s1829, 128
          %s1834 = scalar_lea.hbm %s9, %s1833
          %s1835 = sshll.u32 %s1820, 4
          %s1836 = int_to_ptr.vmem [resolvable:$true] %s1835
          %1841 = dma.vmem_to_hbm [thread:$0]  %s1836, 2048, %s1834, %s1817, 128, 128, 8
        $region129: #{tpu_custom_call.1} parent=92 // pred_fallthru
          _
        // Predicated region
        $region130: #{tpu_custom_call.1} parent=92 // pred_check
          %p1842 = pneg %p288
        $region131: #{tpu_custom_call.1} parent=92 // pred_check_branch
          %1844 = sbr.rel (%p1842) target = $region133
        $region132: #{tpu_custom_call.1} parent=92 // pred_region
          %s1845 = smul.u32 16, %s35
          %s1847 = ssub.s32 2048, 2048
          %1848 = vsyncadd %s1822, %s1847
          %s1849 = smul.addr %s1845, 128
          %s1850 = scalar_lea.hbm %s10, %s1849
          %s1851 = sshll.u32 %s1825, 4
          %s1852 = int_to_ptr.vmem [resolvable:$true] %s1851
          %1857 = dma.vmem_to_hbm [thread:$0]  %s1852, 2048, %s1850, %s1822, 128, 128, 8
        $region133: #{tpu_custom_call.1} parent=92 // pred_fallthru
          _
      $region93: #{tpu_custom_call.1} parent=5 // pred_fallthru
        _
      %p1858 = scmp.le.s32.totalorder 2, %s26
      // Predicated region
      $region134: #{tpu_custom_call.1} parent=5 // pred_check
        %p1859 = pneg %p1858
      $region135: #{tpu_custom_call.1} parent=5 // pred_check_branch
        %1861 = sbr.rel (%p1859) target = $region137
      $region136: #{tpu_custom_call.1} parent=5 // pred_region
        %s1862 = ssub.s32 %s26, 2
        // Predicated region
        $region138: #{tpu_custom_call.1} parent=136 // pred_check
          %p1863 = pneg %p268
        $region139: #{tpu_custom_call.1} parent=136 // pred_check_branch
          %1865 = sbr.rel (%p1863) target = $region141
        $region140: #{tpu_custom_call.1} parent=136 // pred_region
          %s1866 = sand.u32 %s253, 1
          %s1867 = scalar_lea.sflag [#allocation6], %s1866
          %s1868 = sand.u32 %s253, 1
          %s1869 = smul.addr %s1868, 128
          %s1870 = scalar_lea.vmem [#allocation13], %s1869
          %1871 = dma.done %s1867, 2048
        $region141: #{tpu_custom_call.1} parent=136 // pred_fallthru
          _
        // Predicated region
        $region142: #{tpu_custom_call.1} parent=136 // pred_check
          %p1872 = pneg %p294
        $region143: #{tpu_custom_call.1} parent=136 // pred_check_branch
          %1874 = sbr.rel (%p1872) target = $region145
        $region144: #{tpu_custom_call.1} parent=136 // pred_region
          %s1875 = sand.u32 %s279, 1
          %s1876 = scalar_lea.sflag [#allocation15], %s1875
          %s1877 = sand.u32 %s279, 1
          %s1878 = smul.addr %s1877, 128
          %s1879 = scalar_lea.vmem [#allocation14], %s1878
          %1880 = dma.done %s1876, 2048
        $region145: #{tpu_custom_call.1} parent=136 // pred_fallthru
          _
      $region137: #{tpu_custom_call.1} parent=5 // pred_fallthru
        _
    $region6: #{tpu_custom_call.1} parent=1 // loop_footer
      %s30 = sadd.s32 1, %s26
    $region7: #{tpu_custom_call.1} parent=1 // loop_footer_branch
      %25 = sbr.rel target = $region3
    $region8: #{tpu_custom_call.1} parent=1 // loop_exit
      _
    %1881 = vsyncpa [#allocation5], 1
    %s1882 = scalar_lea.sflag [#allocation5], 1
    %1883 = vsyncpa %s1882, 1
    %1884 = vsyncpa [#allocation8], 1
    %1885 = vsyncpa [#allocation11], 1
    %1886 = vsyncpa [#allocation6], 1
    %s1887 = scalar_lea.sflag [#allocation6], 1
    %1888 = vsyncpa %s1887, 1
    %1889 = vsyncpa [#allocation15], 1
    %s1890 = scalar_lea.sflag [#allocation15], 1
    %1891 = vsyncpa %s1890, 1

</llo_original>
